<compile_context>
chip_gen: v7x
topology: tpu7x:2x2x1
jax: 0.10.0
libtpu: 0.0.40
codegen_flags: <defaults>
</compile_context>

<pallas_src>
import math
from functools import partial

import jax
import jax.numpy as jnp
from jax.experimental import pallas as pl
from jax.experimental.pallas import tpu as pltpu


def mha_flash_kernel(xq_ref, xkv_ref, wq_ref, wk_ref, wv_ref,
                     bq_ref, bk_ref, bv_ref, wp_ref, bo_ref, o_ref,
                     q_scr, m_scr, l_scr, acc_scr, ctx_scr,
                     *, n_head, head_dim, tq, tk, approx_recip):
    qi = pl.program_id(1)
    ki = pl.program_id(2)
    num_kv = pl.num_programs(2)
    cd = xq_ref.dtype                     # matmul operand dtype (f32 or bf16)
    hd = head_dim

    # ---- once per q-tile: project (pre-scaled) Q, reset running stats ---------------
    @pl.when(ki == 0)
    def _init():
        q = jnp.dot(xq_ref[0], wq_ref[...],
                    preferred_element_type=jnp.float32) + bq_ref[...]
        for h in range(n_head):
            q_scr[h] = q[:, h * hd:(h + 1) * hd].astype(cd)
        m_scr[...] = jnp.full_like(m_scr, -1e30)
        l_scr[...] = jnp.zeros_like(l_scr)
        acc_scr[...] = jnp.zeros_like(acc_scr)

    # ---- causal block skipping: this kv tile contributes iff kv_start <= q_end ------
    @pl.when(ki * tk <= qi * tq + (tq - 1))
    def _attend():
        # project K / V for this kv tile (f32 accumulation, operands in compute dtype)
        k2 = (jnp.dot(xkv_ref[0], wk_ref[...],
                      preferred_element_type=jnp.float32) + bk_ref[...]).astype(cd)
        v2 = (jnp.dot(xkv_ref[0], wv_ref[...],
                      preferred_element_type=jnp.float32) + bv_ref[...]).astype(cd)

        # per-tile additive causal mask from iota (no (S,S) mask in HBM or VMEM)
        row = qi * tq + jax.lax.broadcasted_iota(jnp.int32, (tq, tk), 0)
        col = ki * tk + jax.lax.broadcasted_iota(jnp.int32, (tq, tk), 1)
        neg = jnp.where(row >= col, 0.0, -1e30).astype(jnp.float32)

        # TODO(synk): for large n_head turn this static unroll into a fori_loop or a
        # grid axis; and with hd < 128 the lane slices below are not (8,128)-aligned --
        # at real shapes group heads so each slice fills 128 lanes.
        for h in range(n_head):
            s = jnp.einsum("qd,kd->qk", q_scr[h], k2[:, h * hd:(h + 1) * hd],
                           preferred_element_type=jnp.float32) + neg
            m_prev = m_scr[h]
            m_new = jnp.maximum(m_prev, jnp.max(s, axis=-1, keepdims=True))
            alpha = jnp.exp(m_prev - m_new)
            p = jnp.exp(s - m_new)
            l_scr[h] = alpha * l_scr[h] + jnp.sum(p, axis=-1, keepdims=True)
            acc_scr[h] = alpha * acc_scr[h] + jnp.dot(
                p.astype(cd), v2[:, h * hd:(h + 1) * hd],
                preferred_element_type=jnp.float32)
            m_scr[h] = m_new

    # ---- once per q-tile: normalize, pack heads into a lane slab, project out -------
    @pl.when(ki == num_kv - 1)
    def _finalize():
        for h in range(n_head):
            l = l_scr[h]
            inv = pl.reciprocal(l, approx=True) if approx_recip else 1.0 / l
            ctx_scr[:, h * hd:(h + 1) * hd] = (acc_scr[h] * inv).astype(ctx_scr.dtype)
        out = jnp.dot(ctx_scr[...], wp_ref[...],
                      preferred_element_type=jnp.float32) + bo_ref[...]
        o_ref[0] = out.astype(o_ref.dtype)


def _vmem_bytes_estimate(tq, tk, E, n_head, hd, cd_itemsize, out_itemsize):
    """Rough VMEM budget: double-buffered tiles + resident weights + scratch + live values."""
    def padded(r, c, b):                        # (8, 128) tile padding
        return (-(-r // 8) * 8) * (-(-c // 128) * 128) * b
    f32 = 4
    b = 0
    b += 2 * padded(tq, E, cd_itemsize) + 2 * padded(tk, E, cd_itemsize)   # x tiles
    b += 2 * padded(tq, E, out_itemsize)                                   # out tile
    b += 2 * 4 * padded(E, E, cd_itemsize)                                 # wq/wk/wv/wproj
    b += 2 * 4 * padded(1, E, f32)                                         # biases
    b += n_head * (padded(tq, hd, cd_itemsize) + padded(tq, hd, f32)
                   + 2 * padded(tq, 1, f32))                               # q/m/l/acc scratch
    b += padded(tq, E, cd_itemsize)                                        # ctx slab
    b += 2 * padded(tk, E, cd_itemsize) + 2 * padded(tk, E, f32)           # k/v live values
    b += padded(tq, E, f32) + 4 * padded(tq, tk, f32)                      # q proj + scores
    return b


def multi_headed_attention(x, params, n_head, *, compute_dtype=None,
                           block_q=128, block_k=128):
    """x: (B, S, E). params = (W_qkv^T (E,3E), b_qkv (1,3E), W_proj^T (E,E), b_proj (1,E))."""
    B, S, E = x.shape
    assert E % n_head == 0
    hd = E // n_head
    wqkv_t, bqkv, wproj_t, bproj = params

    # Split fused QKV weights; fold the 1/sqrt(hd) softmax scale into the Q projection.
    scale = 1.0 / math.sqrt(hd)
    wq_t = wqkv_t[:, :E] * scale
    wk_t = wqkv_t[:, E:2 * E]
    wv_t = wqkv_t[:, 2 * E:]
    bq = (bqkv[:, :E] * scale).astype(jnp.float32)
    bk = bqkv[:, E:2 * E].astype(jnp.float32)
    bv = bqkv[:, 2 * E:].astype(jnp.float32)
    bo = bproj.astype(jnp.float32)

    cd = jnp.dtype(compute_dtype) if compute_dtype is not None else jnp.dtype(x.dtype)
    xk = x.astype(cd)
    wq_t, wk_t, wv_t, wp_t = (w.astype(cd) for w in (wq_t, wk_t, wv_t, wproj_t))

    tq = min(block_q, S)
    tk = min(block_k, S)
    assert S % tq == 0 and S % tk == 0, "seq_len must divide evenly into q/kv tiles"
    grid = (B, S // tq, S // tk)

    act_q_spec = pl.BlockSpec((1, tq, E), lambda b, qi, ki: (b, qi, 0))
    act_kv_spec = pl.BlockSpec((1, tk, E), lambda b, qi, ki: (b, ki, 0))
    w_spec = pl.BlockSpec((E, E), lambda b, qi, ki: (0, 0))
    b_spec = pl.BlockSpec((1, E), lambda b, qi, ki: (0, 0))
    out_spec = pl.BlockSpec((1, tq, E), lambda b, qi, ki: (b, qi, 0))

    est = _vmem_bytes_estimate(tq, tk, E, n_head, hd, cd.itemsize,
                               jnp.dtype(x.dtype).itemsize)
    vmem_limit = int(min(100 * 2**20, max(16 * 2**20, 2 * est)))

    kernel = partial(mha_flash_kernel, n_head=n_head, head_dim=hd, tq=tq, tk=tk,
                     approx_recip=(cd != jnp.dtype(jnp.float32)))

    return pl.pallas_call(
        kernel,
        out_shape=jax.ShapeDtypeStruct((B, S, E), x.dtype),
        grid=grid,
        in_specs=[act_q_spec, act_kv_spec,
                  w_spec, w_spec, w_spec,
                  b_spec, b_spec, b_spec,
                  w_spec, b_spec],
        out_specs=out_spec,
        scratch_shapes=[
            pltpu.VMEM((n_head, tq, hd), cd),            # projected (pre-scaled) q
            pltpu.VMEM((n_head, tq, 1), jnp.float32),    # running max
            pltpu.VMEM((n_head, tq, 1), jnp.float32),    # running denom
            pltpu.VMEM((n_head, tq, hd), jnp.float32),   # running context accumulator
            pltpu.VMEM((tq, E), cd),                     # concat-heads slab for out proj
        ],
        compiler_params=pltpu.CompilerParams(
            dimension_semantics=("parallel", "parallel", "arbitrary"),
            vmem_limit_bytes=vmem_limit),
    )(xk, xk, wq_t, wk_t, wv_t, bq, bk, bv, wp_t, bo)


def reference(x, params, n_head):
    # Plain-JAX reference mirroring the PyTorch forward (with the intended causal mask).
    B, S, E = x.shape
    hd = E // n_head
    wqkv_t, bqkv, wproj_t, bproj = params
    qkv = jnp.einsum("bse,ef->bsf", x, wqkv_t, precision="highest") + bqkv
    q, k, v = jnp.split(qkv, 3, axis=2)
    q = q.reshape(B, S, n_head, hd).transpose(0, 2, 1, 3)
    k = k.reshape(B, S, n_head, hd).transpose(0, 2, 1, 3)
    v = v.reshape(B, S, n_head, hd).transpose(0, 2, 1, 3)
    att = jnp.einsum("bhqd,bhkd->bhqk", q, k, precision="highest") / math.sqrt(hd)
    mask = jnp.tril(jnp.ones((S, S), jnp.float32))
    att = jnp.where(mask[None, None] == 0.0, -jnp.inf, att)
    att = att - jnp.max(att, axis=-1, keepdims=True)
    p = jnp.exp(att)
    att = p / jnp.sum(p, axis=-1, keepdims=True)
    y = jnp.einsum("bhqk,bhkd->bhqd", att, v, precision="highest")
    y = y.transpose(0, 2, 1, 3).reshape(B, S, E)
    return jnp.einsum("bse,ef->bsf", y, wproj_t, precision="highest") + bproj


if __name__ == "__main__":
    # config: n_embd=32, n_head=4, block_size=16, bias=True, dropout=0.0
    B, S = 2, 8
    n_head, n_embd, block_size = 4, 32, 16

    key = jax.random.PRNGKey(0)
    k1, k2, k3, k4, k5, k6 = jax.random.split(key, 6)
    # PyTorch nn.Linear stores weight as (out_features, in_features)
    wqkv = jax.random.normal(k1, (3 * n_embd, n_embd), jnp.float32) * 0.02
    bqkv = jax.random.normal(k2, (1, 3 * n_embd), jnp.float32) * 0.02
    wproj = jax.random.normal(k3, (n_embd, n_embd), jnp.float32) * 0.02
    bproj = jax.random.normal(k4, (1, n_embd), jnp.float32) * 0.02
    x = jax.random.normal(k5, (B, S, n_embd), jnp.float32)

    # pre-transpose so the kernel computes x @ W^T as x @ (W^T)
    params = (wqkv.T, bqkv, wproj.T, bproj)
    ref = reference(x, params, n_head)

    # float32 path (strict check, exact softmax divide)
    out = multi_headed_attention(x, params, n_head)
    out = jax.block_until_ready(out)
    assert out.shape == (B, S, n_embd)
    assert jnp.allclose(out, ref, atol=5e-4, rtol=5e-4), float(jnp.max(jnp.abs(out - ref)))

    # bfloat16 matmul-operand path (v6e/v7x MXU peak; f32 accumulation) -- looser tolerance
    out_bf16 = multi_headed_attention(x, params, n_head, compute_dtype=jnp.bfloat16)
    out_bf16 = jax.block_until_ready(out_bf16)
    assert jnp.allclose(out_bf16, ref, atol=2e-2, rtol=2e-2), \
        float(jnp.max(jnp.abs(out_bf16 - ref)))

    # multi-tile flash path: block_size-length sequences tiled into (8, 8) q/kv blocks,
    # exercising the online softmax, per-block causal mask and causal block skipping.
    x2 = jax.random.normal(k6, (B, block_size, n_embd), jnp.float32)
    ref2 = reference(x2, params, n_head)
    out2 = multi_headed_attention(x2, params, n_head, block_q=8, block_k=8)
    out2 = jax.block_until_ready(out2)
    assert jnp.allclose(out2, ref2, atol=5e-4, rtol=5e-4), \
        float(jnp.max(jnp.abs(out2 - ref2)))

    print("KERNEL_OK")
</pallas_src>

<mosaic_0001>
module attributes {stable_mosaic.version = 11 : i64} {
  func.func @mha_flash_kernel(%arg0: i32, %arg1: i32, %arg2: i32, %arg3: memref<1x8x32xf32, #tpu.memory_space<vmem>>, %arg4: memref<1x8x32xf32, #tpu.memory_space<vmem>>, %arg5: memref<32x32xf32, #tpu.memory_space<vmem>>, %arg6: memref<32x32xf32, #tpu.memory_space<vmem>>, %arg7: memref<32x32xf32, #tpu.memory_space<vmem>>, %arg8: memref<1x32xf32, #tpu.memory_space<vmem>>, %arg9: memref<1x32xf32, #tpu.memory_space<vmem>>, %arg10: memref<1x32xf32, #tpu.memory_space<vmem>>, %arg11: memref<32x32xf32, #tpu.memory_space<vmem>>, %arg12: memref<1x32xf32, #tpu.memory_space<vmem>>, %arg13: memref<1x8x32xf32, #tpu.memory_space<vmem>>, %arg14: memref<4x8x8xf32, #tpu.memory_space<vmem>>, %arg15: memref<4x8x1xf32, #tpu.memory_space<vmem>>, %arg16: memref<4x8x1xf32, #tpu.memory_space<vmem>>, %arg17: memref<4x8x8xf32, #tpu.memory_space<vmem>>, %arg18: memref<8x32xf32, #tpu.memory_space<vmem>>) attributes {dimension_semantics = [#tpu.dimension_semantics<parallel>, #tpu.dimension_semantics<parallel>, #tpu.dimension_semantics<arbitrary>], iteration_bounds = array<i64: 2, 1, 1>, scalar_prefetch = 0 : i64, scratch_operands = 5 : i64, tpu.core_type = #tpu.core_type<tc>, window_params = [{transform_indices = @transform_0, window_bounds = array<i64: 1, 8, 32>}, {transform_indices = @transform_1, window_bounds = array<i64: 1, 8, 32>}, {pipeline_mode = #tpu.pipeline_mode<synchronous>, transform_indices = @transform_2, window_bounds = array<i64: 32, 32>}, {pipeline_mode = #tpu.pipeline_mode<synchronous>, transform_indices = @transform_3, window_bounds = array<i64: 32, 32>}, {pipeline_mode = #tpu.pipeline_mode<synchronous>, transform_indices = @transform_4, window_bounds = array<i64: 32, 32>}, {pipeline_mode = #tpu.pipeline_mode<synchronous>, transform_indices = @transform_5, window_bounds = array<i64: 1, 32>}, {pipeline_mode = #tpu.pipeline_mode<synchronous>, transform_indices = @transform_6, window_bounds = array<i64: 1, 32>}, {pipeline_mode = #tpu.pipeline_mode<synchronous>, transform_indices = @transform_7, window_bounds = array<i64: 1, 32>}, {pipeline_mode = #tpu.pipeline_mode<synchronous>, transform_indices = @transform_8, window_bounds = array<i64: 32, 32>}, {pipeline_mode = #tpu.pipeline_mode<synchronous>, transform_indices = @transform_9, window_bounds = array<i64: 1, 32>}, {transform_indices = @transform_10, window_bounds = array<i64: 1, 8, 32>}]} {
    %c0_i32 = arith.constant 0 : i32
    %0 = arith.cmpi eq, %arg2, %c0_i32 : i32
    %1 = arith.extui %0 : i1 to i32
    %c0_i32_0 = arith.constant 0 : i32
    %2 = arith.cmpi ne, %1, %c0_i32_0 : i32
    scf.if %2 {
      %c0 = arith.constant 0 : index
      %c0_5 = arith.constant 0 : index
      %c0_6 = arith.constant 0 : index
      %12 = vector.load %arg3[%c0, %c0_5, %c0_6] : memref<1x8x32xf32, #tpu.memory_space<vmem>>, vector<1x8x32xf32>
      %13 = vector.shape_cast %12 : vector<1x8x32xf32> to vector<8x32xf32>
      %c0_7 = arith.constant 0 : index
      %c0_8 = arith.constant 0 : index
      %14 = vector.load %arg5[%c0_7, %c0_8] : memref<32x32xf32, #tpu.memory_space<vmem>>, vector<32x32xf32>
      %cst = arith.constant dense<0.000000e+00> : vector<8x32xf32>
      %15 = tpu.matmul %13, %14, %cst {dimension_numbers = #tpu.dot_dimension_numbers<[1], [0], [0], [1], [0, 0, 1, 1], [], []>} : vector<8x32xf32>, vector<32x32xf32>, vector<8x32xf32> -> vector<8x32xf32>
      %c0_9 = arith.constant 0 : index
      %c0_10 = arith.constant 0 : index
      %16 = vector.load %arg8[%c0_9, %c0_10] : memref<1x32xf32, #tpu.memory_space<vmem>>, vector<1x32xf32>
      %17 = vector.broadcast %16 : vector<1x32xf32> to vector<8x32xf32>
      %18 = arith.addf %15, %17 : vector<8x32xf32>
      %19 = vector.extract_strided_slice %18 {offsets = [0, 0], sizes = [8, 8], strides = [1, 1]} : vector<8x32xf32> to vector<8x8xf32>
      %c0_11 = arith.constant 0 : index
      %c0_12 = arith.constant 0 : index
      %c0_13 = arith.constant 0 : index
      %20 = vector.load %arg14[%c0_11, %c0_12, %c0_13] : memref<4x8x8xf32, #tpu.memory_space<vmem>>, vector<1x8x8xf32>
      %21 = vector.shape_cast %20 : vector<1x8x8xf32> to vector<8x8xf32>
      %22 = vector.shape_cast %19 : vector<8x8xf32> to vector<1x8x8xf32>
      tpu.vector_store %arg14[%c0_11, %c0_12, %c0_13], %22 {strides = array<i32>} : memref<4x8x8xf32, #tpu.memory_space<vmem>>, vector<1x8x8xf32>,
      %23 = vector.extract_strided_slice %18 {offsets = [0, 8], sizes = [8, 8], strides = [1, 1]} : vector<8x32xf32> to vector<8x8xf32>
      %c1 = arith.constant 1 : index
      %c0_14 = arith.constant 0 : index
      %c0_15 = arith.constant 0 : index
      %24 = vector.load %arg14[%c1, %c0_14, %c0_15] : memref<4x8x8xf32, #tpu.memory_space<vmem>>, vector<1x8x8xf32>
      %25 = vector.shape_cast %24 : vector<1x8x8xf32> to vector<8x8xf32>
      %26 = vector.shape_cast %23 : vector<8x8xf32> to vector<1x8x8xf32>
      tpu.vector_store %arg14[%c1, %c0_14, %c0_15], %26 {strides = array<i32>} : memref<4x8x8xf32, #tpu.memory_space<vmem>>, vector<1x8x8xf32>,
      %27 = vector.extract_strided_slice %18 {offsets = [0, 16], sizes = [8, 8], strides = [1, 1]} : vector<8x32xf32> to vector<8x8xf32>
      %c2 = arith.constant 2 : index
      %c0_16 = arith.constant 0 : index
      %c0_17 = arith.constant 0 : index
      %28 = vector.load %arg14[%c2, %c0_16, %c0_17] : memref<4x8x8xf32, #tpu.memory_space<vmem>>, vector<1x8x8xf32>
      %29 = vector.shape_cast %28 : vector<1x8x8xf32> to vector<8x8xf32>
      %30 = vector.shape_cast %27 : vector<8x8xf32> to vector<1x8x8xf32>
      tpu.vector_store %arg14[%c2, %c0_16, %c0_17], %30 {strides = array<i32>} : memref<4x8x8xf32, #tpu.memory_space<vmem>>, vector<1x8x8xf32>,
      %31 = vector.extract_strided_slice %18 {offsets = [0, 24], sizes = [8, 8], strides = [1, 1]} : vector<8x32xf32> to vector<8x8xf32>
      %c3 = arith.constant 3 : index
      %c0_18 = arith.constant 0 : index
      %c0_19 = arith.constant 0 : index
      %32 = vector.load %arg14[%c3, %c0_18, %c0_19] : memref<4x8x8xf32, #tpu.memory_space<vmem>>, vector<1x8x8xf32>
      %33 = vector.shape_cast %32 : vector<1x8x8xf32> to vector<8x8xf32>
      %34 = vector.shape_cast %31 : vector<8x8xf32> to vector<1x8x8xf32>
      tpu.vector_store %arg14[%c3, %c0_18, %c0_19], %34 {strides = array<i32>} : memref<4x8x8xf32, #tpu.memory_space<vmem>>, vector<1x8x8xf32>,
      %cst_20 = arith.constant -1.000000e+30 : f32
      %35 = vector.broadcast %cst_20 : f32 to vector<4x8x1xf32>
      %c0_21 = arith.constant 0 : index
      %c0_22 = arith.constant 0 : index
      %c0_23 = arith.constant 0 : index
      %36 = vector.load %arg15[%c0_21, %c0_22, %c0_23] : memref<4x8x1xf32, #tpu.memory_space<vmem>>, vector<4x8x1xf32>
      tpu.vector_store %arg15[%c0_21, %c0_22, %c0_23], %35 {strides = array<i32>} : memref<4x8x1xf32, #tpu.memory_space<vmem>>, vector<4x8x1xf32>,
      %cst_24 = arith.constant 0.000000e+00 : f32
      %37 = vector.broadcast %cst_24 : f32 to vector<4x8x1xf32>
      %c0_25 = arith.constant 0 : index
      %c0_26 = arith.constant 0 : index
      %c0_27 = arith.constant 0 : index
      %38 = vector.load %arg16[%c0_25, %c0_26, %c0_27] : memref<4x8x1xf32, #tpu.memory_space<vmem>>, vector<4x8x1xf32>
      tpu.vector_store %arg16[%c0_25, %c0_26, %c0_27], %37 {strides = array<i32>} : memref<4x8x1xf32, #tpu.memory_space<vmem>>, vector<4x8x1xf32>,
      %cst_28 = arith.constant 0.000000e+00 : f32
      %39 = vector.broadcast %cst_28 : f32 to vector<4x8x8xf32>
      %c0_29 = arith.constant 0 : index
      %c0_30 = arith.constant 0 : index
      %c0_31 = arith.constant 0 : index
      %40 = vector.load %arg17[%c0_29, %c0_30, %c0_31] : memref<4x8x8xf32, #tpu.memory_space<vmem>>, vector<4x8x8xf32>
      tpu.vector_store %arg17[%c0_29, %c0_30, %c0_31], %39 {strides = array<i32>} : memref<4x8x8xf32, #tpu.memory_space<vmem>>, vector<4x8x8xf32>,
    } else {
    }
    %c8_i32 = arith.constant 8 : i32
    %3 = arith.muli %arg2, %c8_i32 : i32
    %c8_i32_1 = arith.constant 8 : i32
    %4 = arith.muli %arg1, %c8_i32_1 : i32
    %c7_i32 = arith.constant 7 : i32
    %5 = arith.addi %4, %c7_i32 : i32
    %6 = arith.cmpi sle, %3, %5 : i32
    %7 = arith.extui %6 : i1 to i32
    %c0_i32_2 = arith.constant 0 : i32
    %8 = arith.cmpi ne, %7, %c0_i32_2 : i32
    scf.if %8 {
      %c0 = arith.constant 0 : index
      %c0_5 = arith.constant 0 : index
      %c0_6 = arith.constant 0 : index
      %12 = vector.load %arg4[%c0, %c0_5, %c0_6] : memref<1x8x32xf32, #tpu.memory_space<vmem>>, vector<1x8x32xf32>
      %13 = vector.shape_cast %12 : vector<1x8x32xf32> to vector<8x32xf32>
      %c0_7 = arith.constant 0 : index
      %c0_8 = arith.constant 0 : index
      %14 = vector.load %arg6[%c0_7, %c0_8] : memref<32x32xf32, #tpu.memory_space<vmem>>, vector<32x32xf32>
      %cst = arith.constant dense<0.000000e+00> : vector<8x32xf32>
      %15 = tpu.matmul %13, %14, %cst {dimension_numbers = #tpu.dot_dimension_numbers<[1], [0], [0], [1], [0, 0, 1, 1], [], []>} : vector<8x32xf32>, vector<32x32xf32>, vector<8x32xf32> -> vector<8x32xf32>
      %c0_9 = arith.constant 0 : index
      %c0_10 = arith.constant 0 : index
      %16 = vector.load %arg9[%c0_9, %c0_10] : memref<1x32xf32, #tpu.memory_space<vmem>>, vector<1x32xf32>
      %17 = vector.broadcast %16 : vector<1x32xf32> to vector<8x32xf32>
      %18 = arith.addf %15, %17 : vector<8x32xf32>
      %c0_11 = arith.constant 0 : index
      %c0_12 = arith.constant 0 : index
      %c0_13 = arith.constant 0 : index
      %19 = vector.load %arg4[%c0_11, %c0_12, %c0_13] : memref<1x8x32xf32, #tpu.memory_space<vmem>>, vector<1x8x32xf32>
      %20 = vector.shape_cast %19 : vector<1x8x32xf32> to vector<8x32xf32>
      %c0_14 = arith.constant 0 : index
      %c0_15 = arith.constant 0 : index
      %21 = vector.load %arg7[%c0_14, %c0_15] : memref<32x32xf32, #tpu.memory_space<vmem>>, vector<32x32xf32>
      %cst_16 = arith.constant dense<0.000000e+00> : vector<8x32xf32>
      %22 = tpu.matmul %20, %21, %cst_16 {dimension_numbers = #tpu.dot_dimension_numbers<[1], [0], [0], [1], [0, 0, 1, 1], [], []>} : vector<8x32xf32>, vector<32x32xf32>, vector<8x32xf32> -> vector<8x32xf32>
      %c0_17 = arith.constant 0 : index
      %c0_18 = arith.constant 0 : index
      %23 = vector.load %arg10[%c0_17, %c0_18] : memref<1x32xf32, #tpu.memory_space<vmem>>, vector<1x32xf32>
      %24 = vector.broadcast %23 : vector<1x32xf32> to vector<8x32xf32>
      %25 = arith.addf %22, %24 : vector<8x32xf32>
      %c8_i32_19 = arith.constant 8 : i32
      %26 = arith.muli %arg1, %c8_i32_19 : i32
      %27 = tpu.iota {dimensions = array<i32: 0>} : vector<8x8xi32>
      %28 = vector.broadcast %26 : i32 to vector<8x8xi32>
      %29 = arith.addi %28, %27 : vector<8x8xi32>
      %c8_i32_20 = arith.constant 8 : i32
      %30 = arith.muli %arg2, %c8_i32_20 : i32
      %31 = tpu.iota {dimensions = array<i32: 1>} : vector<8x8xi32>
      %32 = vector.broadcast %30 : i32 to vector<8x8xi32>
      %33 = arith.addi %32, %31 : vector<8x8xi32>
      %34 = arith.cmpi sge, %29, %33 : vector<8x8xi32>
      %cst_21 = arith.constant 0.000000e+00 : f32
      %cst_22 = arith.constant -1.000000e+30 : f32
      %35 = vector.broadcast %cst_21 : f32 to vector<8x8xf32>
      %36 = vector.broadcast %cst_22 : f32 to vector<8x8xf32>
      %37 = arith.select %34, %35, %36 : vector<8x8xi1>, vector<8x8xf32>
      %c0_23 = arith.constant 0 : index
      %c0_24 = arith.constant 0 : index
      %c0_25 = arith.constant 0 : index
      %38 = vector.load %arg14[%c0_23, %c0_24, %c0_25] : memref<4x8x8xf32, #tpu.memory_space<vmem>>, vector<1x8x8xf32>
      %39 = vector.shape_cast %38 : vector<1x8x8xf32> to vector<8x8xf32>
      %40 = vector.extract_strided_slice %18 {offsets = [0, 0], sizes = [8, 8], strides = [1, 1]} : vector<8x32xf32> to vector<8x8xf32>
      "tpu.trace_start"() <{level = 10 : i32, message = "qd,kd->qk"}> : () -> ()
      %cst_26 = arith.constant dense<0.000000e+00> : vector<8x8xf32>
      %41 = tpu.matmul %39, %40, %cst_26 {dimension_numbers = #tpu.dot_dimension_numbers<[1], [1], [0], [0], [0, 0, 1, 0], [], []>} : vector<8x8xf32>, vector<8x8xf32>, vector<8x8xf32> -> vector<8x8xf32>
      "tpu.trace_stop"() : () -> ()
      %42 = arith.addf %41, %37 : vector<8x8xf32>
      %c0_27 = arith.constant 0 : index
      %c0_28 = arith.constant 0 : index
      %c0_29 = arith.constant 0 : index
      %43 = vector.load %arg15[%c0_27, %c0_28, %c0_29] : memref<4x8x1xf32, #tpu.memory_space<vmem>>, vector<1x8x1xf32>
      %44 = vector.shape_cast %43 : vector<1x8x1xf32> to vector<8x1xf32>
      %cst_30 = arith.constant dense<0xFF800000> : vector<8xf32>
      %45 = vector.multi_reduction <maximumf>, %42, %cst_30 [1] : vector<8x8xf32> to vector<8xf32>
      %46 = vector.shape_cast %45 : vector<8xf32> to vector<8x1xf32>
      %47 = arith.maximumf %44, %46 : vector<8x1xf32>
      %48 = arith.subf %44, %47 : vector<8x1xf32>
      %49 = math.exp %48 : vector<8x1xf32>
      %50 = vector.broadcast %47 : vector<8x1xf32> to vector<8x8xf32>
      %51 = arith.subf %42, %50 : vector<8x8xf32>
      %52 = math.exp %51 : vector<8x8xf32>
      %c0_31 = arith.constant 0 : index
      %c0_32 = arith.constant 0 : index
      %c0_33 = arith.constant 0 : index
      %53 = vector.load %arg16[%c0_31, %c0_32, %c0_33] : memref<4x8x1xf32, #tpu.memory_space<vmem>>, vector<1x8x1xf32>
      %54 = vector.shape_cast %53 : vector<1x8x1xf32> to vector<8x1xf32>
      %55 = arith.mulf %49, %54 : vector<8x1xf32>
      %cst_34 = arith.constant dense<0.000000e+00> : vector<8xf32>
      %56 = vector.multi_reduction <add>, %52, %cst_34 [1] : vector<8x8xf32> to vector<8xf32>
      %57 = vector.shape_cast %56 : vector<8xf32> to vector<8x1xf32>
      %58 = arith.addf %55, %57 : vector<8x1xf32>
      %c0_35 = arith.constant 0 : index
      %c0_36 = arith.constant 0 : index
      %c0_37 = arith.constant 0 : index
      %59 = vector.load %arg16[%c0_35, %c0_36, %c0_37] : memref<4x8x1xf32, #tpu.memory_space<vmem>>, vector<1x8x1xf32>
      %60 = vector.shape_cast %59 : vector<1x8x1xf32> to vector<8x1xf32>
      %61 = vector.shape_cast %58 : vector<8x1xf32> to vector<1x8x1xf32>
      tpu.vector_store %arg16[%c0_35, %c0_36, %c0_37], %61 {strides = array<i32>} : memref<4x8x1xf32, #tpu.memory_space<vmem>>, vector<1x8x1xf32>,
      %c0_38 = arith.constant 0 : index
      %c0_39 = arith.constant 0 : index
      %c0_40 = arith.constant 0 : index
      %62 = vector.load %arg17[%c0_38, %c0_39, %c0_40] : memref<4x8x8xf32, #tpu.memory_space<vmem>>, vector<1x8x8xf32>
      %63 = vector.shape_cast %62 : vector<1x8x8xf32> to vector<8x8xf32>
      %64 = vector.broadcast %49 : vector<8x1xf32> to vector<8x8xf32>
      %65 = arith.mulf %64, %63 : vector<8x8xf32>
      %66 = vector.extract_strided_slice %25 {offsets = [0, 0], sizes = [8, 8], strides = [1, 1]} : vector<8x32xf32> to vector<8x8xf32>
      %cst_41 = arith.constant dense<0.000000e+00> : vector<8x8xf32>
      %67 = tpu.matmul %52, %66, %cst_41 {dimension_numbers = #tpu.dot_dimension_numbers<[1], [0], [0], [1], [0, 0, 1, 1], [], []>} : vector<8x8xf32>, vector<8x8xf32>, vector<8x8xf32> -> vector<8x8xf32>
      %68 = arith.addf %65, %67 : vector<8x8xf32>
      %c0_42 = arith.constant 0 : index
      %c0_43 = arith.constant 0 : index
      %c0_44 = arith.constant 0 : index
      %69 = vector.load %arg17[%c0_42, %c0_43, %c0_44] : memref<4x8x8xf32, #tpu.memory_space<vmem>>, vector<1x8x8xf32>
      %70 = vector.shape_cast %69 : vector<1x8x8xf32> to vector<8x8xf32>
      %71 = vector.shape_cast %68 : vector<8x8xf32> to vector<1x8x8xf32>
      tpu.vector_store %arg17[%c0_42, %c0_43, %c0_44], %71 {strides = array<i32>} : memref<4x8x8xf32, #tpu.memory_space<vmem>>, vector<1x8x8xf32>,
      %c0_45 = arith.constant 0 : index
      %c0_46 = arith.constant 0 : index
      %c0_47 = arith.constant 0 : index
      %72 = vector.load %arg15[%c0_45, %c0_46, %c0_47] : memref<4x8x1xf32, #tpu.memory_space<vmem>>, vector<1x8x1xf32>
      %73 = vector.shape_cast %72 : vector<1x8x1xf32> to vector<8x1xf32>
      %74 = vector.shape_cast %47 : vector<8x1xf32> to vector<1x8x1xf32>
      tpu.vector_store %arg15[%c0_45, %c0_46, %c0_47], %74 {strides = array<i32>} : memref<4x8x1xf32, #tpu.memory_space<vmem>>, vector<1x8x1xf32>,
      %c1 = arith.constant 1 : index
      %c0_48 = arith.constant 0 : index
      %c0_49 = arith.constant 0 : index
      %75 = vector.load %arg14[%c1, %c0_48, %c0_49] : memref<4x8x8xf32, #tpu.memory_space<vmem>>, vector<1x8x8xf32>
      %76 = vector.shape_cast %75 : vector<1x8x8xf32> to vector<8x8xf32>
      %77 = vector.extract_strided_slice %18 {offsets = [0, 8], sizes = [8, 8], strides = [1, 1]} : vector<8x32xf32> to vector<8x8xf32>
      "tpu.trace_start"() <{level = 10 : i32, message = "qd,kd->qk"}> : () -> ()
      %cst_50 = arith.constant dense<0.000000e+00> : vector<8x8xf32>
      %78 = tpu.matmul %76, %77, %cst_50 {dimension_numbers = #tpu.dot_dimension_numbers<[1], [1], [0], [0], [0, 0, 1, 0], [], []>} : vector<8x8xf32>, vector<8x8xf32>, vector<8x8xf32> -> vector<8x8xf32>
      "tpu.trace_stop"() : () -> ()
      %79 = arith.addf %78, %37 : vector<8x8xf32>
      %c1_51 = arith.constant 1 : index
      %c0_52 = arith.constant 0 : index
      %c0_53 = arith.constant 0 : index
      %80 = vector.load %arg15[%c1_51, %c0_52, %c0_53] : memref<4x8x1xf32, #tpu.memory_space<vmem>>, vector<1x8x1xf32>
      %81 = vector.shape_cast %80 : vector<1x8x1xf32> to vector<8x1xf32>
      %cst_54 = arith.constant dense<0xFF800000> : vector<8xf32>
      %82 = vector.multi_reduction <maximumf>, %79, %cst_54 [1] : vector<8x8xf32> to vector<8xf32>
      %83 = vector.shape_cast %82 : vector<8xf32> to vector<8x1xf32>
      %84 = arith.maximumf %81, %83 : vector<8x1xf32>
      %85 = arith.subf %81, %84 : vector<8x1xf32>
      %86 = math.exp %85 : vector<8x1xf32>
      %87 = vector.broadcast %84 : vector<8x1xf32> to vector<8x8xf32>
      %88 = arith.subf %79, %87 : vector<8x8xf32>
      %89 = math.exp %88 : vector<8x8xf32>
      %c1_55 = arith.constant 1 : index
      %c0_56 = arith.constant 0 : index
      %c0_57 = arith.constant 0 : index
      %90 = vector.load %arg16[%c1_55, %c0_56, %c0_57] : memref<4x8x1xf32, #tpu.memory_space<vmem>>, vector<1x8x1xf32>
      %91 = vector.shape_cast %90 : vector<1x8x1xf32> to vector<8x1xf32>
      %92 = arith.mulf %86, %91 : vector<8x1xf32>
      %cst_58 = arith.constant dense<0.000000e+00> : vector<8xf32>
      %93 = vector.multi_reduction <add>, %89, %cst_58 [1] : vector<8x8xf32> to vector<8xf32>
      %94 = vector.shape_cast %93 : vector<8xf32> to vector<8x1xf32>
      %95 = arith.addf %92, %94 : vector<8x1xf32>
      %c1_59 = arith.constant 1 : index
      %c0_60 = arith.constant 0 : index
      %c0_61 = arith.constant 0 : index
      %96 = vector.load %arg16[%c1_59, %c0_60, %c0_61] : memref<4x8x1xf32, #tpu.memory_space<vmem>>, vector<1x8x1xf32>
      %97 = vector.shape_cast %96 : vector<1x8x1xf32> to vector<8x1xf32>
      %98 = vector.shape_cast %95 : vector<8x1xf32> to vector<1x8x1xf32>
      tpu.vector_store %arg16[%c1_59, %c0_60, %c0_61], %98 {strides = array<i32>} : memref<4x8x1xf32, #tpu.memory_space<vmem>>, vector<1x8x1xf32>,
      %c1_62 = arith.constant 1 : index
      %c0_63 = arith.constant 0 : index
      %c0_64 = arith.constant 0 : index
      %99 = vector.load %arg17[%c1_62, %c0_63, %c0_64] : memref<4x8x8xf32, #tpu.memory_space<vmem>>, vector<1x8x8xf32>
      %100 = vector.shape_cast %99 : vector<1x8x8xf32> to vector<8x8xf32>
      %101 = vector.broadcast %86 : vector<8x1xf32> to vector<8x8xf32>
      %102 = arith.mulf %101, %100 : vector<8x8xf32>
      %103 = vector.extract_strided_slice %25 {offsets = [0, 8], sizes = [8, 8], strides = [1, 1]} : vector<8x32xf32> to vector<8x8xf32>
      %cst_65 = arith.constant dense<0.000000e+00> : vector<8x8xf32>
      %104 = tpu.matmul %89, %103, %cst_65 {dimension_numbers = #tpu.dot_dimension_numbers<[1], [0], [0], [1], [0, 0, 1, 1], [], []>} : vector<8x8xf32>, vector<8x8xf32>, vector<8x8xf32> -> vector<8x8xf32>
      %105 = arith.addf %102, %104 : vector<8x8xf32>
      %c1_66 = arith.constant 1 : index
      %c0_67 = arith.constant 0 : index
      %c0_68 = arith.constant 0 : index
      %106 = vector.load %arg17[%c1_66, %c0_67, %c0_68] : memref<4x8x8xf32, #tpu.memory_space<vmem>>, vector<1x8x8xf32>
      %107 = vector.shape_cast %106 : vector<1x8x8xf32> to vector<8x8xf32>
      %108 = vector.shape_cast %105 : vector<8x8xf32> to vector<1x8x8xf32>
      tpu.vector_store %arg17[%c1_66, %c0_67, %c0_68], %108 {strides = array<i32>} : memref<4x8x8xf32, #tpu.memory_space<vmem>>, vector<1x8x8xf32>,
      %c1_69 = arith.constant 1 : index
      %c0_70 = arith.constant 0 : index
      %c0_71 = arith.constant 0 : index
      %109 = vector.load %arg15[%c1_69, %c0_70, %c0_71] : memref<4x8x1xf32, #tpu.memory_space<vmem>>, vector<1x8x1xf32>
      %110 = vector.shape_cast %109 : vector<1x8x1xf32> to vector<8x1xf32>
      %111 = vector.shape_cast %84 : vector<8x1xf32> to vector<1x8x1xf32>
      tpu.vector_store %arg15[%c1_69, %c0_70, %c0_71], %111 {strides = array<i32>} : memref<4x8x1xf32, #tpu.memory_space<vmem>>, vector<1x8x1xf32>,
      %c2 = arith.constant 2 : index
      %c0_72 = arith.constant 0 : index
      %c0_73 = arith.constant 0 : index
      %112 = vector.load %arg14[%c2, %c0_72, %c0_73] : memref<4x8x8xf32, #tpu.memory_space<vmem>>, vector<1x8x8xf32>
      %113 = vector.shape_cast %112 : vector<1x8x8xf32> to vector<8x8xf32>
      %114 = vector.extract_strided_slice %18 {offsets = [0, 16], sizes = [8, 8], strides = [1, 1]} : vector<8x32xf32> to vector<8x8xf32>
      "tpu.trace_start"() <{level = 10 : i32, message = "qd,kd->qk"}> : () -> ()
      %cst_74 = arith.constant dense<0.000000e+00> : vector<8x8xf32>
      %115 = tpu.matmul %113, %114, %cst_74 {dimension_numbers = #tpu.dot_dimension_numbers<[1], [1], [0], [0], [0, 0, 1, 0], [], []>} : vector<8x8xf32>, vector<8x8xf32>, vector<8x8xf32> -> vector<8x8xf32>
      "tpu.trace_stop"() : () -> ()
      %116 = arith.addf %115, %37 : vector<8x8xf32>
      %c2_75 = arith.constant 2 : index
      %c0_76 = arith.constant 0 : index
      %c0_77 = arith.constant 0 : index
      %117 = vector.load %arg15[%c2_75, %c0_76, %c0_77] : memref<4x8x1xf32, #tpu.memory_space<vmem>>, vector<1x8x1xf32>
      %118 = vector.shape_cast %117 : vector<1x8x1xf32> to vector<8x1xf32>
      %cst_78 = arith.constant dense<0xFF800000> : vector<8xf32>
      %119 = vector.multi_reduction <maximumf>, %116, %cst_78 [1] : vector<8x8xf32> to vector<8xf32>
      %120 = vector.shape_cast %119 : vector<8xf32> to vector<8x1xf32>
      %121 = arith.maximumf %118, %120 : vector<8x1xf32>
      %122 = arith.subf %118, %121 : vector<8x1xf32>
      %123 = math.exp %122 : vector<8x1xf32>
      %124 = vector.broadcast %121 : vector<8x1xf32> to vector<8x8xf32>
      %125 = arith.subf %116, %124 : vector<8x8xf32>
      %126 = math.exp %125 : vector<8x8xf32>
      %c2_79 = arith.constant 2 : index
      %c0_80 = arith.constant 0 : index
      %c0_81 = arith.constant 0 : index
      %127 = vector.load %arg16[%c2_79, %c0_80, %c0_81] : memref<4x8x1xf32, #tpu.memory_space<vmem>>, vector<1x8x1xf32>
      %128 = vector.shape_cast %127 : vector<1x8x1xf32> to vector<8x1xf32>
      %129 = arith.mulf %123, %128 : vector<8x1xf32>
      %cst_82 = arith.constant dense<0.000000e+00> : vector<8xf32>
      %130 = vector.multi_reduction <add>, %126, %cst_82 [1] : vector<8x8xf32> to vector<8xf32>
      %131 = vector.shape_cast %130 : vector<8xf32> to vector<8x1xf32>
      %132 = arith.addf %129, %131 : vector<8x1xf32>
      %c2_83 = arith.constant 2 : index
      %c0_84 = arith.constant 0 : index
      %c0_85 = arith.constant 0 : index
      %133 = vector.load %arg16[%c2_83, %c0_84, %c0_85] : memref<4x8x1xf32, #tpu.memory_space<vmem>>, vector<1x8x1xf32>
      %134 = vector.shape_cast %133 : vector<1x8x1xf32> to vector<8x1xf32>
      %135 = vector.shape_cast %132 : vector<8x1xf32> to vector<1x8x1xf32>
      tpu.vector_store %arg16[%c2_83, %c0_84, %c0_85], %135 {strides = array<i32>} : memref<4x8x1xf32, #tpu.memory_space<vmem>>, vector<1x8x1xf32>,
      %c2_86 = arith.constant 2 : index
      %c0_87 = arith.constant 0 : index
      %c0_88 = arith.constant 0 : index
      %136 = vector.load %arg17[%c2_86, %c0_87, %c0_88] : memref<4x8x8xf32, #tpu.memory_space<vmem>>, vector<1x8x8xf32>
      %137 = vector.shape_cast %136 : vector<1x8x8xf32> to vector<8x8xf32>
      %138 = vector.broadcast %123 : vector<8x1xf32> to vector<8x8xf32>
      %139 = arith.mulf %138, %137 : vector<8x8xf32>
      %140 = vector.extract_strided_slice %25 {offsets = [0, 16], sizes = [8, 8], strides = [1, 1]} : vector<8x32xf32> to vector<8x8xf32>
      %cst_89 = arith.constant dense<0.000000e+00> : vector<8x8xf32>
      %141 = tpu.matmul %126, %140, %cst_89 {dimension_numbers = #tpu.dot_dimension_numbers<[1], [0], [0], [1], [0, 0, 1, 1], [], []>} : vector<8x8xf32>, vector<8x8xf32>, vector<8x8xf32> -> vector<8x8xf32>
      %142 = arith.addf %139, %141 : vector<8x8xf32>
      %c2_90 = arith.constant 2 : index
      %c0_91 = arith.constant 0 : index
      %c0_92 = arith.constant 0 : index
      %143 = vector.load %arg17[%c2_90, %c0_91, %c0_92] : memref<4x8x8xf32, #tpu.memory_space<vmem>>, vector<1x8x8xf32>
      %144 = vector.shape_cast %143 : vector<1x8x8xf32> to vector<8x8xf32>
      %145 = vector.shape_cast %142 : vector<8x8xf32> to vector<1x8x8xf32>
      tpu.vector_store %arg17[%c2_90, %c0_91, %c0_92], %145 {strides = array<i32>} : memref<4x8x8xf32, #tpu.memory_space<vmem>>, vector<1x8x8xf32>,
      %c2_93 = arith.constant 2 : index
      %c0_94 = arith.constant 0 : index
      %c0_95 = arith.constant 0 : index
      %146 = vector.load %arg15[%c2_93, %c0_94, %c0_95] : memref<4x8x1xf32, #tpu.memory_space<vmem>>, vector<1x8x1xf32>
      %147 = vector.shape_cast %146 : vector<1x8x1xf32> to vector<8x1xf32>
      %148 = vector.shape_cast %121 : vector<8x1xf32> to vector<1x8x1xf32>
      tpu.vector_store %arg15[%c2_93, %c0_94, %c0_95], %148 {strides = array<i32>} : memref<4x8x1xf32, #tpu.memory_space<vmem>>, vector<1x8x1xf32>,
      %c3 = arith.constant 3 : index
      %c0_96 = arith.constant 0 : index
      %c0_97 = arith.constant 0 : index
      %149 = vector.load %arg14[%c3, %c0_96, %c0_97] : memref<4x8x8xf32, #tpu.memory_space<vmem>>, vector<1x8x8xf32>
      %150 = vector.shape_cast %149 : vector<1x8x8xf32> to vector<8x8xf32>
      %151 = vector.extract_strided_slice %18 {offsets = [0, 24], sizes = [8, 8], strides = [1, 1]} : vector<8x32xf32> to vector<8x8xf32>
      "tpu.trace_start"() <{level = 10 : i32, message = "qd,kd->qk"}> : () -> ()
      %cst_98 = arith.constant dense<0.000000e+00> : vector<8x8xf32>
      %152 = tpu.matmul %150, %151, %cst_98 {dimension_numbers = #tpu.dot_dimension_numbers<[1], [1], [0], [0], [0, 0, 1, 0], [], []>} : vector<8x8xf32>, vector<8x8xf32>, vector<8x8xf32> -> vector<8x8xf32>
      "tpu.trace_stop"() : () -> ()
      %153 = arith.addf %152, %37 : vector<8x8xf32>
      %c3_99 = arith.constant 3 : index
      %c0_100 = arith.constant 0 : index
      %c0_101 = arith.constant 0 : index
      %154 = vector.load %arg15[%c3_99, %c0_100, %c0_101] : memref<4x8x1xf32, #tpu.memory_space<vmem>>, vector<1x8x1xf32>
      %155 = vector.shape_cast %154 : vector<1x8x1xf32> to vector<8x1xf32>
      %cst_102 = arith.constant dense<0xFF800000> : vector<8xf32>
      %156 = vector.multi_reduction <maximumf>, %153, %cst_102 [1] : vector<8x8xf32> to vector<8xf32>
      %157 = vector.shape_cast %156 : vector<8xf32> to vector<8x1xf32>
      %158 = arith.maximumf %155, %157 : vector<8x1xf32>
      %159 = arith.subf %155, %158 : vector<8x1xf32>
      %160 = math.exp %159 : vector<8x1xf32>
      %161 = vector.broadcast %158 : vector<8x1xf32> to vector<8x8xf32>
      %162 = arith.subf %153, %161 : vector<8x8xf32>
      %163 = math.exp %162 : vector<8x8xf32>
      %c3_103 = arith.constant 3 : index
      %c0_104 = arith.constant 0 : index
      %c0_105 = arith.constant 0 : index
      %164 = vector.load %arg16[%c3_103, %c0_104, %c0_105] : memref<4x8x1xf32, #tpu.memory_space<vmem>>, vector<1x8x1xf32>
      %165 = vector.shape_cast %164 : vector<1x8x1xf32> to vector<8x1xf32>
      %166 = arith.mulf %160, %165 : vector<8x1xf32>
      %cst_106 = arith.constant dense<0.000000e+00> : vector<8xf32>
      %167 = vector.multi_reduction <add>, %163, %cst_106 [1] : vector<8x8xf32> to vector<8xf32>
      %168 = vector.shape_cast %167 : vector<8xf32> to vector<8x1xf32>
      %169 = arith.addf %166, %168 : vector<8x1xf32>
      %c3_107 = arith.constant 3 : index
      %c0_108 = arith.constant 0 : index
      %c0_109 = arith.constant 0 : index
      %170 = vector.load %arg16[%c3_107, %c0_108, %c0_109] : memref<4x8x1xf32, #tpu.memory_space<vmem>>, vector<1x8x1xf32>
      %171 = vector.shape_cast %170 : vector<1x8x1xf32> to vector<8x1xf32>
      %172 = vector.shape_cast %169 : vector<8x1xf32> to vector<1x8x1xf32>
      tpu.vector_store %arg16[%c3_107, %c0_108, %c0_109], %172 {strides = array<i32>} : memref<4x8x1xf32, #tpu.memory_space<vmem>>, vector<1x8x1xf32>,
      %c3_110 = arith.constant 3 : index
      %c0_111 = arith.constant 0 : index
      %c0_112 = arith.constant 0 : index
      %173 = vector.load %arg17[%c3_110, %c0_111, %c0_112] : memref<4x8x8xf32, #tpu.memory_space<vmem>>, vector<1x8x8xf32>
      %174 = vector.shape_cast %173 : vector<1x8x8xf32> to vector<8x8xf32>
      %175 = vector.broadcast %160 : vector<8x1xf32> to vector<8x8xf32>
      %176 = arith.mulf %175, %174 : vector<8x8xf32>
      %177 = vector.extract_strided_slice %25 {offsets = [0, 24], sizes = [8, 8], strides = [1, 1]} : vector<8x32xf32> to vector<8x8xf32>
      %cst_113 = arith.constant dense<0.000000e+00> : vector<8x8xf32>
      %178 = tpu.matmul %163, %177, %cst_113 {dimension_numbers = #tpu.dot_dimension_numbers<[1], [0], [0], [1], [0, 0, 1, 1], [], []>} : vector<8x8xf32>, vector<8x8xf32>, vector<8x8xf32> -> vector<8x8xf32>
      %179 = arith.addf %176, %178 : vector<8x8xf32>
      %c3_114 = arith.constant 3 : index
      %c0_115 = arith.constant 0 : index
      %c0_116 = arith.constant 0 : index
      %180 = vector.load %arg17[%c3_114, %c0_115, %c0_116] : memref<4x8x8xf32, #tpu.memory_space<vmem>>, vector<1x8x8xf32>
      %181 = vector.shape_cast %180 : vector<1x8x8xf32> to vector<8x8xf32>
      %182 = vector.shape_cast %179 : vector<8x8xf32> to vector<1x8x8xf32>
      tpu.vector_store %arg17[%c3_114, %c0_115, %c0_116], %182 {strides = array<i32>} : memref<4x8x8xf32, #tpu.memory_space<vmem>>, vector<1x8x8xf32>,
      %c3_117 = arith.constant 3 : index
      %c0_118 = arith.constant 0 : index
      %c0_119 = arith.constant 0 : index
      %183 = vector.load %arg15[%c3_117, %c0_118, %c0_119] : memref<4x8x1xf32, #tpu.memory_space<vmem>>, vector<1x8x1xf32>
      %184 = vector.shape_cast %183 : vector<1x8x1xf32> to vector<8x1xf32>
      %185 = vector.shape_cast %158 : vector<8x1xf32> to vector<1x8x1xf32>
      tpu.vector_store %arg15[%c3_117, %c0_118, %c0_119], %185 {strides = array<i32>} : memref<4x8x1xf32, #tpu.memory_space<vmem>>, vector<1x8x1xf32>,
    } else {
    }
    %c0_i32_3 = arith.constant 0 : i32
    %9 = arith.cmpi eq, %arg2, %c0_i32_3 : i32
    %10 = arith.extui %9 : i1 to i32
    %c0_i32_4 = arith.constant 0 : i32
    %11 = arith.cmpi ne, %10, %c0_i32_4 : i32
    scf.if %11 {
      %c0 = arith.constant 0 : index
      %c0_5 = arith.constant 0 : index
      %c0_6 = arith.constant 0 : index
      %12 = vector.load %arg16[%c0, %c0_5, %c0_6] : memref<4x8x1xf32, #tpu.memory_space<vmem>>, vector<1x8x1xf32>
      %13 = vector.shape_cast %12 : vector<1x8x1xf32> to vector<8x1xf32>
      %cst = arith.constant 1.000000e+00 : f32
      %14 = vector.broadcast %cst : f32 to vector<8x1xf32>
      %15 = arith.divf %14, %13 : vector<8x1xf32>
      %c0_7 = arith.constant 0 : index
      %c0_8 = arith.constant 0 : index
      %c0_9 = arith.constant 0 : index
      %16 = vector.load %arg17[%c0_7, %c0_8, %c0_9] : memref<4x8x8xf32, #tpu.memory_space<vmem>>, vector<1x8x8xf32>
      %17 = vector.shape_cast %16 : vector<1x8x8xf32> to vector<8x8xf32>
      %18 = vector.broadcast %15 : vector<8x1xf32> to vector<8x8xf32>
      %19 = arith.mulf %17, %18 : vector<8x8xf32>
      %c0_10 = arith.constant 0 : index
      %c0_11 = arith.constant 0 : index
      %20 = vector.load %arg18[%c0_10, %c0_11] : memref<8x32xf32, #tpu.memory_space<vmem>>, vector<8x8xf32>
      tpu.vector_store %arg18[%c0_10, %c0_11], %19 {strides = array<i32>} : memref<8x32xf32, #tpu.memory_space<vmem>>, vector<8x8xf32>,
      %c1 = arith.constant 1 : index
      %c0_12 = arith.constant 0 : index
      %c0_13 = arith.constant 0 : index
      %21 = vector.load %arg16[%c1, %c0_12, %c0_13] : memref<4x8x1xf32, #tpu.memory_space<vmem>>, vector<1x8x1xf32>
      %22 = vector.shape_cast %21 : vector<1x8x1xf32> to vector<8x1xf32>
      %cst_14 = arith.constant 1.000000e+00 : f32
      %23 = vector.broadcast %cst_14 : f32 to vector<8x1xf32>
      %24 = arith.divf %23, %22 : vector<8x1xf32>
      %c1_15 = arith.constant 1 : index
      %c0_16 = arith.constant 0 : index
      %c0_17 = arith.constant 0 : index
      %25 = vector.load %arg17[%c1_15, %c0_16, %c0_17] : memref<4x8x8xf32, #tpu.memory_space<vmem>>, vector<1x8x8xf32>
      %26 = vector.shape_cast %25 : vector<1x8x8xf32> to vector<8x8xf32>
      %27 = vector.broadcast %24 : vector<8x1xf32> to vector<8x8xf32>
      %28 = arith.mulf %26, %27 : vector<8x8xf32>
      %c0_18 = arith.constant 0 : index
      %c8 = arith.constant 8 : index
      %29 = vector.load %arg18[%c0_18, %c8] : memref<8x32xf32, #tpu.memory_space<vmem>>, vector<8x8xf32>
      tpu.vector_store %arg18[%c0_18, %c8], %28 {strides = array<i32>} : memref<8x32xf32, #tpu.memory_space<vmem>>, vector<8x8xf32>,
      %c2 = arith.constant 2 : index
      %c0_19 = arith.constant 0 : index
      %c0_20 = arith.constant 0 : index
      %30 = vector.load %arg16[%c2, %c0_19, %c0_20] : memref<4x8x1xf32, #tpu.memory_space<vmem>>, vector<1x8x1xf32>
      %31 = vector.shape_cast %30 : vector<1x8x1xf32> to vector<8x1xf32>
      %cst_21 = arith.constant 1.000000e+00 : f32
      %32 = vector.broadcast %cst_21 : f32 to vector<8x1xf32>
      %33 = arith.divf %32, %31 : vector<8x1xf32>
      %c2_22 = arith.constant 2 : index
      %c0_23 = arith.constant 0 : index
      %c0_24 = arith.constant 0 : index
      %34 = vector.load %arg17[%c2_22, %c0_23, %c0_24] : memref<4x8x8xf32, #tpu.memory_space<vmem>>, vector<1x8x8xf32>
      %35 = vector.shape_cast %34 : vector<1x8x8xf32> to vector<8x8xf32>
      %36 = vector.broadcast %33 : vector<8x1xf32> to vector<8x8xf32>
      %37 = arith.mulf %35, %36 : vector<8x8xf32>
      %c0_25 = arith.constant 0 : index
      %c16 = arith.constant 16 : index
      %38 = vector.load %arg18[%c0_25, %c16] : memref<8x32xf32, #tpu.memory_space<vmem>>, vector<8x8xf32>
      tpu.vector_store %arg18[%c0_25, %c16], %37 {strides = array<i32>} : memref<8x32xf32, #tpu.memory_space<vmem>>, vector<8x8xf32>,
      %c3 = arith.constant 3 : index
      %c0_26 = arith.constant 0 : index
      %c0_27 = arith.constant 0 : index
      %39 = vector.load %arg16[%c3, %c0_26, %c0_27] : memref<4x8x1xf32, #tpu.memory_space<vmem>>, vector<1x8x1xf32>
      %40 = vector.shape_cast %39 : vector<1x8x1xf32> to vector<8x1xf32>
      %cst_28 = arith.constant 1.000000e+00 : f32
      %41 = vector.broadcast %cst_28 : f32 to vector<8x1xf32>
      %42 = arith.divf %41, %40 : vector<8x1xf32>
      %c3_29 = arith.constant 3 : index
      %c0_30 = arith.constant 0 : index
      %c0_31 = arith.constant 0 : index
      %43 = vector.load %arg17[%c3_29, %c0_30, %c0_31] : memref<4x8x8xf32, #tpu.memory_space<vmem>>, vector<1x8x8xf32>
      %44 = vector.shape_cast %43 : vector<1x8x8xf32> to vector<8x8xf32>
      %45 = vector.broadcast %42 : vector<8x1xf32> to vector<8x8xf32>
      %46 = arith.mulf %44, %45 : vector<8x8xf32>
      %c0_32 = arith.constant 0 : index
      %c24 = arith.constant 24 : index
      %47 = vector.load %arg18[%c0_32, %c24] : memref<8x32xf32, #tpu.memory_space<vmem>>, vector<8x8xf32>
      tpu.vector_store %arg18[%c0_32, %c24], %46 {strides = array<i32>} : memref<8x32xf32, #tpu.memory_space<vmem>>, vector<8x8xf32>,
      %c0_33 = arith.constant 0 : index
      %c0_34 = arith.constant 0 : index
      %48 = vector.load %arg18[%c0_33, %c0_34] : memref<8x32xf32, #tpu.memory_space<vmem>>, vector<8x32xf32>
      %c0_35 = arith.constant 0 : index
      %c0_36 = arith.constant 0 : index
      %49 = vector.load %arg11[%c0_35, %c0_36] : memref<32x32xf32, #tpu.memory_space<vmem>>, vector<32x32xf32>
      %cst_37 = arith.constant dense<0.000000e+00> : vector<8x32xf32>
      %50 = tpu.matmul %48, %49, %cst_37 {dimension_numbers = #tpu.dot_dimension_numbers<[1], [0], [0], [1], [0, 0, 1, 1], [], []>} : vector<8x32xf32>, vector<32x32xf32>, vector<8x32xf32> -> vector<8x32xf32>
      %c0_38 = arith.constant 0 : index
      %c0_39 = arith.constant 0 : index
      %51 = vector.load %arg12[%c0_38, %c0_39] : memref<1x32xf32, #tpu.memory_space<vmem>>, vector<1x32xf32>
      %52 = vector.broadcast %51 : vector<1x32xf32> to vector<8x32xf32>
      %53 = arith.addf %50, %52 : vector<8x32xf32>
      %c0_40 = arith.constant 0 : index
      %c0_41 = arith.constant 0 : index
      %c0_42 = arith.constant 0 : index
      %54 = vector.load %arg13[%c0_40, %c0_41, %c0_42] : memref<1x8x32xf32, #tpu.memory_space<vmem>>, vector<1x8x32xf32>
      %55 = vector.shape_cast %54 : vector<1x8x32xf32> to vector<8x32xf32>
      %56 = vector.shape_cast %53 : vector<8x32xf32> to vector<1x8x32xf32>
      tpu.vector_store %arg13[%c0_40, %c0_41, %c0_42], %56 {strides = array<i32>} : memref<1x8x32xf32, #tpu.memory_space<vmem>>, vector<1x8x32xf32>,
    } else {
    }
    return
  }
  func.func @transform_0(%arg0: i32, %arg1: i32, %arg2: i32) -> (i32, i32, i32) {
    %c0_i32 = arith.constant 0 : i32
    %c0_i32_0 = arith.constant 0 : i32
    return %arg0, %arg1, %c0_i32 : i32, i32, i32
  }
  func.func @transform_1(%arg0: i32, %arg1: i32, %arg2: i32) -> (i32, i32, i32) {
    %c0_i32 = arith.constant 0 : i32
    %c0_i32_0 = arith.constant 0 : i32
    return %arg0, %arg2, %c0_i32 : i32, i32, i32
  }
  func.func @transform_2(%arg0: i32, %arg1: i32, %arg2: i32) -> (i32, i32) {
    %c0_i32 = arith.constant 0 : i32
    %c0_i32_0 = arith.constant 0 : i32
    %c0_i32_1 = arith.constant 0 : i32
    return %c0_i32, %c0_i32_0 : i32, i32
  }
  func.func @transform_3(%arg0: i32, %arg1: i32, %arg2: i32) -> (i32, i32) {
    %c0_i32 = arith.constant 0 : i32
    %c0_i32_0 = arith.constant 0 : i32
    %c0_i32_1 = arith.constant 0 : i32
    return %c0_i32, %c0_i32_0 : i32, i32
  }
  func.func @transform_4(%arg0: i32, %arg1: i32, %arg2: i32) -> (i32, i32) {
    %c0_i32 = arith.constant 0 : i32
    %c0_i32_0 = arith.constant 0 : i32
    %c0_i32_1 = arith.constant 0 : i32
    return %c0_i32, %c0_i32_0 : i32, i32
  }
  func.func @transform_5(%arg0: i32, %arg1: i32, %arg2: i32) -> (i32, i32) {
    %c0_i32 = arith.constant 0 : i32
    %c0_i32_0 = arith.constant 0 : i32
    %c0_i32_1 = arith.constant 0 : i32
    return %c0_i32, %c0_i32_0 : i32, i32
  }
  func.func @transform_6(%arg0: i32, %arg1: i32, %arg2: i32) -> (i32, i32) {
    %c0_i32 = arith.constant 0 : i32
    %c0_i32_0 = arith.constant 0 : i32
    %c0_i32_1 = arith.constant 0 : i32
    return %c0_i32, %c0_i32_0 : i32, i32
  }
  func.func @transform_7(%arg0: i32, %arg1: i32, %arg2: i32) -> (i32, i32) {
    %c0_i32 = arith.constant 0 : i32
    %c0_i32_0 = arith.constant 0 : i32
    %c0_i32_1 = arith.constant 0 : i32
    return %c0_i32, %c0_i32_0 : i32, i32
  }
  func.func @transform_8(%arg0: i32, %arg1: i32, %arg2: i32) -> (i32, i32) {
    %c0_i32 = arith.constant 0 : i32
    %c0_i32_0 = arith.constant 0 : i32
    %c0_i32_1 = arith.constant 0 : i32
    return %c0_i32, %c0_i32_0 : i32, i32
  }
  func.func @transform_9(%arg0: i32, %arg1: i32, %arg2: i32) -> (i32, i32) {
    %c0_i32 = arith.constant 0 : i32
    %c0_i32_0 = arith.constant 0 : i32
    %c0_i32_1 = arith.constant 0 : i32
    return %c0_i32, %c0_i32_0 : i32, i32
  }
  func.func @transform_10(%arg0: i32, %arg1: i32, %arg2: i32) -> (i32, i32, i32) {
    %c0_i32 = arith.constant 0 : i32
    %c0_i32_0 = arith.constant 0 : i32
    return %arg0, %arg1, %c0_i32 : i32, i32, i32
  }
}

</mosaic_0001>

<llo_original>
// kernel: tpu_custom_call.1
$region0: #{tpu_custom_call.1}
  #allocation0 [shape = 'u32[]', space=smem, size = 0x4, offset = 0x4, fixed_abs, tag = 'smem constant byte address 0x4 - core index']
  #allocation1 [shape = 'u32[144,128]{1,0:T(1,128)}', space=vmem, size = 0x12000, scoped, tag = 'internal scratch']
  #allocation2 [shape = 'f32[4,8,8]{2,1,0:T(8,128)}', space=vmem, size = 0x4000, scoped, tag = 'scratch operand']
  #allocation3 [shape = 'f32[4,8,1]{2,1,0:T(8,128)}', space=vmem, size = 0x4000, scoped, tag = 'scratch operand']
  #allocation4 [shape = 'f32[4,8,1]{2,1,0:T(8,128)}', space=vmem, size = 0x4000, scoped, tag = 'scratch operand']
  #allocation5 [shape = 'f32[4,8,8]{2,1,0:T(8,128)}', space=vmem, size = 0x4000, scoped, tag = 'scratch operand']
  #allocation6 [shape = 'f32[8,32]{1,0:T(8,128)}', space=vmem, size = 0x1000, scoped, tag = 'scratch operand']
  %s0 = inlined_call_operand.hbm [shape: f32[2,8,32], index: 0, kind: input, shape index: {}]
  %s1 = inlined_call_operand.hbm [shape: f32[2,8,32], index: 1, kind: input, shape index: {}]
  %s2 = inlined_call_operand.hbm [shape: f32[32,32], index: 2, kind: input, shape index: {}]
  %s3 = inlined_call_operand.hbm [shape: f32[32,32], index: 3, kind: input, shape index: {}]
  %s4 = inlined_call_operand.hbm [shape: f32[32,32], index: 4, kind: input, shape index: {}]
  %s5 = inlined_call_operand.vmem [shape: f32[1,32], index: 5, kind: input, shape index: {}]
  %s6 = inlined_call_operand.vmem [shape: f32[1,32], index: 6, kind: input, shape index: {}]
  %s7 = inlined_call_operand.vmem [shape: f32[1,32], index: 7, kind: input, shape index: {}]
  %s8 = inlined_call_operand.hbm [shape: f32[32,32], index: 8, kind: input, shape index: {}]
  %s9 = inlined_call_operand.vmem [shape: f32[1,32], index: 9, kind: input, shape index: {}]
  %s10 = inlined_call_operand.hbm [shape: f32[2,8,32], index: 10, kind: output, shape index: {}]
  %s11 = sld [smem:[#allocation0]]
  $region109: #{tpu_custom_call.1} parent=0
    _
  %s13 = ssub.s32 1, %s11
  %s14 = scalar_select 0, %s13, %s11
  $region1: #{tpu_custom_call.1} parent=0
    #allocation7 [shape = 'u8[8192]{0}', space=vmem, size = 0x2000, scoped, tag = 'input window, operand 0']
    #allocation8 [shape = 's32[2]{0}', space=sflag, size = 0x8, scoped, tag = 'scoped memory for tpu_custom_call.1']
    #allocation9 [shape = 's32[2]{0}', space=sflag, size = 0x8, scoped, tag = 'scoped memory for tpu_custom_call.1']
    #allocation10 [shape = 'u8[8192]{0}', space=vmem, size = 0x2000, scoped, tag = 'input window, operand 1']
    #allocation11 [shape = 's32[2]{0}', space=sflag, size = 0x8, scoped, tag = 'scoped memory for tpu_custom_call.1']
    #allocation12 [shape = 'u8[16384]{0}', space=vmem, size = 0x4000, scoped, tag = 'input window, operand 2, single buffered']
    #allocation13 [shape = 'u8[16384]{0}', space=vmem, size = 0x4000, scoped, tag = 'input window, operand 3, single buffered']
    #allocation14 [shape = 's32[1]{0}', space=sflag, size = 0x4, scoped, tag = 'scoped memory for tpu_custom_call.1']
    #allocation15 [shape = 'u8[16384]{0}', space=vmem, size = 0x4000, scoped, tag = 'input window, operand 4, single buffered']
    #allocation16 [shape = 'u8[16384]{0}', space=vmem, size = 0x4000, scoped, tag = 'input window, operand 8, single buffered']
    #allocation17 [shape = 's32[1]{0}', space=sflag, size = 0x4, scoped, tag = 'scoped memory for tpu_custom_call.1']
    #allocation18 [shape = 'u8[8192]{0}', space=vmem, size = 0x2000, scoped, tag = 'output window, operand 0']
    %15 = vsyncpa [#allocation8], 0
    %s16 = scalar_lea.sflag [#allocation8], 1
    %17 = vsyncpa %s16, 0
    %18 = vsyncpa [#allocation11], 0
    %s19 = scalar_lea.sflag [#allocation11], 1
    %20 = vsyncpa %s19, 0
    %21 = vsyncpa [#allocation14], 0
    %22 = vsyncpa [#allocation17], 0
    %23 = vsyncpa [#allocation9], 0
    %s24 = scalar_lea.sflag [#allocation9], 1
    %25 = vsyncpa %s24, 0
    loop: start=0, step=1, limit=4
    $region2: #{tpu_custom_call.1} parent=1 // loop_pre_header
      _
    $region3: #{tpu_custom_call.1} parent=1 // loop_header
      %s27 = sphi 0, %s31
      %p28 = scmp.ge.s32.totalorder %s27, 4
      %s34 = sphi 0, %s53
      %s35 = sphi 0, %s49
      %s36 = sphi 0, %s45
      %s37 = sphi 0, %s34
      %s38 = sphi 0, %s35
      %s39 = sphi 0, %s36
      %s40 = sphi 0, %s37
      %s41 = sphi 0, %s38
      %s42 = sphi 0, %s39
      %s58 = sphi 0, %s60
      %s61 = sphi 0, %s58
      %s62 = sphi 0, %s61
      %s78 = sphi 0, %s62
      %s86 = sphi 0, %s88
      %s89 = sphi 0, %s86
      %s90 = sphi 0, %s89
      %s106 = sphi 0, %s90
      %s110 = sphi 0, %s110
      %s112 = sphi 0, %s110
      %s113 = sphi 0, %s112
      %s127 = sphi 0, %s113
      %s131 = sphi 0, %s131
      %s133 = sphi 0, %s131
      %s134 = sphi 0, %s133
      %s148 = sphi 0, %s134
      %s152 = sphi 0, %s152
      %s154 = sphi 0, %s152
      %s155 = sphi 0, %s154
      %s169 = sphi 0, %s155
      %s173 = sphi 0, %s173
      %s175 = sphi 0, %s173
      %s176 = sphi 0, %s175
      %s190 = sphi 0, %s176
      %s194 = sphi 0, %s194
      %s196 = sphi 0, %s194
      %s197 = sphi 0, %s196
      %s211 = sphi 0, %s197
      %s215 = sphi 0, %s215
      %s217 = sphi 0, %s215
      %s218 = sphi 0, %s217
      %s232 = sphi 0, %s218
      %s236 = sphi 0, %s236
      %s238 = sphi 0, %s236
      %s239 = sphi 0, %s238
      %s253 = sphi 0, %s239
      %s257 = sphi 0, %s257
      %s259 = sphi 0, %s257
      %s260 = sphi 0, %s259
      %s274 = sphi 0, %s260
      %s282 = sphi 0, %s284
      %s285 = sphi 0, %s282
      %s286 = sphi 0, %s285
      %s302 = sphi 0, %s286
    $region4: #{tpu_custom_call.1} parent=1 // loop_header_branch
      %30 = sbr.rel (%p28) target = $region8
    $region5: #{tpu_custom_call.1} parent=1 // loop_body
      %s32 = ssub.s32 %s27, 1
      %s33 = ssub.s32 %s27, 2
      %s43 = sadd.s32 1, %s36
      %p44 = scmp.ge.s32.totalorder %s43, 1
      %s45 = scalar_select %p44, 0, %s43
      %s46 = sadd.s32 1, %s35
      %s47 = scalar_select %p44, %s46, %s35
      %p48 = scmp.ge.s32.totalorder %s47, 1
      %s49 = scalar_select %p48, 0, %s47
      %s50 = sadd.s32 1, %s34
      %s51 = scalar_select %p48, %s50, %s34
      %p52 = scmp.ge.s32.totalorder %s51, 2
      %s53 = scalar_select %p52, 0, %s51
      %s54 = ssub.s32 %s34, %s53
      %s55 = ssub.s32 %s35, %s49
      %s56 = sor.u32 %s54, %s55
      %p57 = scmp.eq.s32.totalorder %s56, 0
      %s59 = sadd.s32 %s58, 1
      %s60 = scalar_select %p57, %s58, %s59
      %p63 = pneg %p57
      %p64 = scmp.eq.s32.totalorder %s27, 1
      %p65 = por %p63, %p64
      %p66 = scmp.ne.s32.totalorder %s58, %s61
      %p67 = scmp.eq.s32.totalorder %s27, 0
      %p68 = por %p66, %p67
      %p69 = scmp.ne.s32.totalorder %s58, %s61
      %p70 = scmp.eq.s32.totalorder %s32, 1
      %p71 = por %p69, %p70
      %p72 = scmp.ne.s32.totalorder %s61, %s62
      %p73 = scmp.eq.s32.totalorder %s32, 0
      %p74 = por %p72, %p73
      %p75 = scmp.ne.s32.totalorder %s61, %s62
      %p76 = scmp.eq.s32.totalorder %s33, 1
      %p77 = por %p75, %p76
      %p79 = scmp.ne.s32.totalorder %s62, %s78
      %p80 = scmp.eq.s32.totalorder %s33, 0
      %p81 = por %p79, %p80
      %s82 = ssub.s32 %s34, %s53
      %s83 = ssub.s32 %s36, %s45
      %s84 = sor.u32 %s82, %s83
      %p85 = scmp.eq.s32.totalorder %s84, 0
      %s87 = sadd.s32 %s86, 1
      %s88 = scalar_select %p85, %s86, %s87
      %p91 = pneg %p85
      %p92 = scmp.eq.s32.totalorder %s27, 1
      %p93 = por %p91, %p92
      %p94 = scmp.ne.s32.totalorder %s86, %s89
      %p95 = scmp.eq.s32.totalorder %s27, 0
      %p96 = por %p94, %p95
      %p97 = scmp.ne.s32.totalorder %s86, %s89
      %p98 = scmp.eq.s32.totalorder %s32, 1
      %p99 = por %p97, %p98
      %p100 = scmp.ne.s32.totalorder %s89, %s90
      %p101 = scmp.eq.s32.totalorder %s32, 0
      %p102 = por %p100, %p101
      %p103 = scmp.ne.s32.totalorder %s89, %s90
      %p104 = scmp.eq.s32.totalorder %s33, 1
      %p105 = por %p103, %p104
      %p107 = scmp.ne.s32.totalorder %s90, %s106
      %p108 = scmp.eq.s32.totalorder %s33, 0
      %p109 = por %p107, %p108
      %s111 = sadd.s32 %s110, 1
      %p114 = scmp.eq.s32.totalorder %s27, 1
      %p115 = scmp.ne.s32.totalorder %s110, %s112
      %p116 = scmp.eq.s32.totalorder %s27, 0
      %p117 = por %p115, %p116
      %p118 = scmp.ne.s32.totalorder %s110, %s112
      %p119 = scmp.eq.s32.totalorder %s32, 1
      %p120 = por %p118, %p119
      %p121 = scmp.ne.s32.totalorder %s112, %s113
      %p122 = scmp.eq.s32.totalorder %s32, 0
      %p123 = por %p121, %p122
      %p124 = scmp.ne.s32.totalorder %s112, %s113
      %p125 = scmp.eq.s32.totalorder %s33, 1
      %p126 = por %p124, %p125
      %p128 = scmp.ne.s32.totalorder %s113, %s127
      %p129 = scmp.eq.s32.totalorder %s33, 0
      %p130 = por %p128, %p129
      %s132 = sadd.s32 %s131, 1
      %p135 = scmp.eq.s32.totalorder %s27, 1
      %p136 = scmp.ne.s32.totalorder %s131, %s133
      %p137 = scmp.eq.s32.totalorder %s27, 0
      %p138 = por %p136, %p137
      %p139 = scmp.ne.s32.totalorder %s131, %s133
      %p140 = scmp.eq.s32.totalorder %s32, 1
      %p141 = por %p139, %p140
      %p142 = scmp.ne.s32.totalorder %s133, %s134
      %p143 = scmp.eq.s32.totalorder %s32, 0
      %p144 = por %p142, %p143
      %p145 = scmp.ne.s32.totalorder %s133, %s134
      %p146 = scmp.eq.s32.totalorder %s33, 1
      %p147 = por %p145, %p146
      %p149 = scmp.ne.s32.totalorder %s134, %s148
      %p150 = scmp.eq.s32.totalorder %s33, 0
      %p151 = por %p149, %p150
      %s153 = sadd.s32 %s152, 1
      %p156 = scmp.eq.s32.totalorder %s27, 1
      %p157 = scmp.ne.s32.totalorder %s152, %s154
      %p158 = scmp.eq.s32.totalorder %s27, 0
      %p159 = por %p157, %p158
      %p160 = scmp.ne.s32.totalorder %s152, %s154
      %p161 = scmp.eq.s32.totalorder %s32, 1
      %p162 = por %p160, %p161
      %p163 = scmp.ne.s32.totalorder %s154, %s155
      %p164 = scmp.eq.s32.totalorder %s32, 0
      %p165 = por %p163, %p164
      %p166 = scmp.ne.s32.totalorder %s154, %s155
      %p167 = scmp.eq.s32.totalorder %s33, 1
      %p168 = por %p166, %p167
      %p170 = scmp.ne.s32.totalorder %s155, %s169
      %p171 = scmp.eq.s32.totalorder %s33, 0
      %p172 = por %p170, %p171
      %s174 = sadd.s32 %s173, 1
      %p177 = scmp.eq.s32.totalorder %s27, 1
      %p178 = scmp.ne.s32.totalorder %s173, %s175
      %p179 = scmp.eq.s32.totalorder %s27, 0
      %p180 = por %p178, %p179
      %p181 = scmp.ne.s32.totalorder %s173, %s175
      %p182 = scmp.eq.s32.totalorder %s32, 1
      %p183 = por %p181, %p182
      %p184 = scmp.ne.s32.totalorder %s175, %s176
      %p185 = scmp.eq.s32.totalorder %s32, 0
      %p186 = por %p184, %p185
      %p187 = scmp.ne.s32.totalorder %s175, %s176
      %p188 = scmp.eq.s32.totalorder %s33, 1
      %p189 = por %p187, %p188
      %p191 = scmp.ne.s32.totalorder %s176, %s190
      %p192 = scmp.eq.s32.totalorder %s33, 0
      %p193 = por %p191, %p192
      %s195 = sadd.s32 %s194, 1
      %p198 = scmp.eq.s32.totalorder %s27, 1
      %p199 = scmp.ne.s32.totalorder %s194, %s196
      %p200 = scmp.eq.s32.totalorder %s27, 0
      %p201 = por %p199, %p200
      %p202 = scmp.ne.s32.totalorder %s194, %s196
      %p203 = scmp.eq.s32.totalorder %s32, 1
      %p204 = por %p202, %p203
      %p205 = scmp.ne.s32.totalorder %s196, %s197
      %p206 = scmp.eq.s32.totalorder %s32, 0
      %p207 = por %p205, %p206
      %p208 = scmp.ne.s32.totalorder %s196, %s197
      %p209 = scmp.eq.s32.totalorder %s33, 1
      %p210 = por %p208, %p209
      %p212 = scmp.ne.s32.totalorder %s197, %s211
      %p213 = scmp.eq.s32.totalorder %s33, 0
      %p214 = por %p212, %p213
      %s216 = sadd.s32 %s215, 1
      %p219 = scmp.eq.s32.totalorder %s27, 1
      %p220 = scmp.ne.s32.totalorder %s215, %s217
      %p221 = scmp.eq.s32.totalorder %s27, 0
      %p222 = por %p220, %p221
      %p223 = scmp.ne.s32.totalorder %s215, %s217
      %p224 = scmp.eq.s32.totalorder %s32, 1
      %p225 = por %p223, %p224
      %p226 = scmp.ne.s32.totalorder %s217, %s218
      %p227 = scmp.eq.s32.totalorder %s32, 0
      %p228 = por %p226, %p227
      %p229 = scmp.ne.s32.totalorder %s217, %s218
      %p230 = scmp.eq.s32.totalorder %s33, 1
      %p231 = por %p229, %p230
      %p233 = scmp.ne.s32.totalorder %s218, %s232
      %p234 = scmp.eq.s32.totalorder %s33, 0
      %p235 = por %p233, %p234
      %s237 = sadd.s32 %s236, 1
      %p240 = scmp.eq.s32.totalorder %s27, 1
      %p241 = scmp.ne.s32.totalorder %s236, %s238
      %p242 = scmp.eq.s32.totalorder %s27, 0
      %p243 = por %p241, %p242
      %p244 = scmp.ne.s32.totalorder %s236, %s238
      %p245 = scmp.eq.s32.totalorder %s32, 1
      %p246 = por %p244, %p245
      %p247 = scmp.ne.s32.totalorder %s238, %s239
      %p248 = scmp.eq.s32.totalorder %s32, 0
      %p249 = por %p247, %p248
      %p250 = scmp.ne.s32.totalorder %s238, %s239
      %p251 = scmp.eq.s32.totalorder %s33, 1
      %p252 = por %p250, %p251
      %p254 = scmp.ne.s32.totalorder %s239, %s253
      %p255 = scmp.eq.s32.totalorder %s33, 0
      %p256 = por %p254, %p255
      %s258 = sadd.s32 %s257, 1
      %p261 = scmp.eq.s32.totalorder %s27, 1
      %p262 = scmp.ne.s32.totalorder %s257, %s259
      %p263 = scmp.eq.s32.totalorder %s27, 0
      %p264 = por %p262, %p263
      %p265 = scmp.ne.s32.totalorder %s257, %s259
      %p266 = scmp.eq.s32.totalorder %s32, 1
      %p267 = por %p265, %p266
      %p268 = scmp.ne.s32.totalorder %s259, %s260
      %p269 = scmp.eq.s32.totalorder %s32, 0
      %p270 = por %p268, %p269
      %p271 = scmp.ne.s32.totalorder %s259, %s260
      %p272 = scmp.eq.s32.totalorder %s33, 1
      %p273 = por %p271, %p272
      %p275 = scmp.ne.s32.totalorder %s260, %s274
      %p276 = scmp.eq.s32.totalorder %s33, 0
      %p277 = por %p275, %p276
      %s278 = ssub.s32 %s34, %s53
      %s279 = ssub.s32 %s35, %s49
      %s280 = sor.u32 %s278, %s279
      %p281 = scmp.eq.s32.totalorder %s280, 0
      %s283 = sadd.s32 %s282, 1
      %s284 = scalar_select %p281, %s282, %s283
      %p287 = pneg %p281
      %p288 = scmp.eq.s32.totalorder %s27, 1
      %p289 = por %p287, %p288
      %p290 = scmp.ne.s32.totalorder %s282, %s285
      %p291 = scmp.eq.s32.totalorder %s27, 0
      %p292 = por %p290, %p291
      %p293 = scmp.ne.s32.totalorder %s282, %s285
      %p294 = scmp.eq.s32.totalorder %s32, 1
      %p295 = por %p293, %p294
      %p296 = scmp.ne.s32.totalorder %s285, %s286
      %p297 = scmp.eq.s32.totalorder %s32, 0
      %p298 = por %p296, %p297
      %p299 = scmp.ne.s32.totalorder %s285, %s286
      %p300 = scmp.eq.s32.totalorder %s33, 1
      %p301 = por %p299, %p300
      %p303 = scmp.ne.s32.totalorder %s286, %s302
      %p304 = scmp.eq.s32.totalorder %s33, 0
      %p305 = por %p303, %p304
      %p306 = scmp.le.s32.totalorder 1, %s27
      %p307 = scmp.lt.s32.totalorder %s27, 3
      %p308 = pnand %p306, %p307
      %p309 = pneg %p308
      // Predicated region
      $region9: #{tpu_custom_call.1} parent=5 // pred_check
        _
      $region10: #{tpu_custom_call.1} parent=5 // pred_check_branch
        %311 = sbr.rel (%p308) target = $region12
      $region11: #{tpu_custom_call.1} parent=5 // pred_region
        %s312 = ssub.s32 %s27, 1
        // Predicated region
        $region13: #{tpu_custom_call.1} parent=11 // pred_check
          %p313 = pneg %p123
        $region14: #{tpu_custom_call.1} parent=11 // pred_check_branch
          %315 = sbr.rel (%p313) target = $region16
        $region15: #{tpu_custom_call.1} parent=11 // pred_region
          %s317 = ssub.s32 512, 512
          %318 = vsyncadd [#allocation11], %s317
          %s319 = sshll.u32 [#allocation12], 4
          %s320 = int_to_ptr.vmem [resolvable:$true] %s319
          %325 = dma.hbm_to_vmem [thread:$0]  %s2, 512, %s320, [#allocation11], 128, 128, 8
        $region16: #{tpu_custom_call.1} parent=11 // pred_fallthru
          _
        // Predicated region
        $region17: #{tpu_custom_call.1} parent=11 // pred_check
          %p326 = pneg %p144
        $region18: #{tpu_custom_call.1} parent=11 // pred_check_branch
          %328 = sbr.rel (%p326) target = $region20
        $region19: #{tpu_custom_call.1} parent=11 // pred_region
          %s330 = ssub.s32 512, 512
          %331 = vsyncadd [#allocation14], %s330
          %s332 = sshll.u32 [#allocation13], 4
          %s333 = int_to_ptr.vmem [resolvable:$true] %s332
          %338 = dma.hbm_to_vmem [thread:$0]  %s3, 512, %s333, [#allocation14], 128, 128, 8
        $region20: #{tpu_custom_call.1} parent=11 // pred_fallthru
          _
        // Predicated region
        $region21: #{tpu_custom_call.1} parent=11 // pred_check
          %p339 = pneg %p165
        $region22: #{tpu_custom_call.1} parent=11 // pred_check_branch
          %341 = sbr.rel (%p339) target = $region24
        $region23: #{tpu_custom_call.1} parent=11 // pred_region
          %s343 = ssub.s32 512, 512
          %344 = vsyncadd [#allocation14], %s343
          %s345 = sshll.u32 [#allocation15], 4
          %s346 = int_to_ptr.vmem [resolvable:$true] %s345
          %351 = dma.hbm_to_vmem [thread:$0]  %s4, 512, %s346, [#allocation14], 128, 128, 8
        $region24: #{tpu_custom_call.1} parent=11 // pred_fallthru
          _
        // Predicated region
        $region25: #{tpu_custom_call.1} parent=11 // pred_check
          %p352 = pneg %p186
        $region26: #{tpu_custom_call.1} parent=11 // pred_check_branch
          %354 = sbr.rel (%p352) target = $region28
        $region27: #{tpu_custom_call.1} parent=11 // pred_region
          _
        $region28: #{tpu_custom_call.1} parent=11 // pred_fallthru
          _
        // Predicated region
        $region29: #{tpu_custom_call.1} parent=11 // pred_check
          %p355 = pneg %p207
        $region30: #{tpu_custom_call.1} parent=11 // pred_check_branch
          %357 = sbr.rel (%p355) target = $region32
        $region31: #{tpu_custom_call.1} parent=11 // pred_region
          _
        $region32: #{tpu_custom_call.1} parent=11 // pred_fallthru
          _
        // Predicated region
        $region33: #{tpu_custom_call.1} parent=11 // pred_check
          %p358 = pneg %p228
        $region34: #{tpu_custom_call.1} parent=11 // pred_check_branch
          %360 = sbr.rel (%p358) target = $region36
        $region35: #{tpu_custom_call.1} parent=11 // pred_region
          _
        $region36: #{tpu_custom_call.1} parent=11 // pred_fallthru
          _
        // Predicated region
        $region37: #{tpu_custom_call.1} parent=11 // pred_check
          %p361 = pneg %p249
        $region38: #{tpu_custom_call.1} parent=11 // pred_check_branch
          %363 = sbr.rel (%p361) target = $region40
        $region39: #{tpu_custom_call.1} parent=11 // pred_region
          %s365 = ssub.s32 512, 512
          %366 = vsyncadd [#allocation17], %s365
          %s367 = sshll.u32 [#allocation16], 4
          %s368 = int_to_ptr.vmem [resolvable:$true] %s367
          %373 = dma.hbm_to_vmem [thread:$0]  %s8, 512, %s368, [#allocation17], 128, 128, 8
        $region40: #{tpu_custom_call.1} parent=11 // pred_fallthru
          _
        // Predicated region
        $region41: #{tpu_custom_call.1} parent=11 // pred_check
          %p374 = pneg %p270
        $region42: #{tpu_custom_call.1} parent=11 // pred_check_branch
          %376 = sbr.rel (%p374) target = $region44
        $region43: #{tpu_custom_call.1} parent=11 // pred_region
          _
        $region44: #{tpu_custom_call.1} parent=11 // pred_fallthru
          _
      $region12: #{tpu_custom_call.1} parent=5 // pred_fallthru
        _
      %p377 = scmp.lt.s32.totalorder %s27, 2
      // Predicated region
      $region45: #{tpu_custom_call.1} parent=5 // pred_check
        %p378 = pneg %p377
      $region46: #{tpu_custom_call.1} parent=5 // pred_check_branch
        %380 = sbr.rel (%p378) target = $region48
      $region47: #{tpu_custom_call.1} parent=5 // pred_region
        // Predicated region
        $region49: #{tpu_custom_call.1} parent=47 // pred_check
          %p381 = pneg %p68
        $region50: #{tpu_custom_call.1} parent=47 // pred_check_branch
          %383 = sbr.rel (%p381) target = $region52
        $region51: #{tpu_custom_call.1} parent=47 // pred_region
          %s384 = sand.u32 %s58, 1
          %s385 = scalar_lea.sflag [#allocation8], %s384
          %s386 = sand.u32 %s58, 1
          %s387 = smul.addr %s386, 8
          %s388 = scalar_lea.vmem [#allocation7], %s387
          %s390 = ssub.s32 128, 128
          %391 = vsyncadd %s385, %s390
          %s392 = sadd.s32 %s35, %s34
          %s393 = smul.addr %s392, 128
          %s394 = scalar_lea.hbm %s0, %s393
          %s396 = sshll.u32 %s388, 4
          %s397 = int_to_ptr.vmem [resolvable:$true] %s396
          %399 = dma.hbm_to_vmem [thread:$0]  %s394, 128, %s397, %s385
        $region52: #{tpu_custom_call.1} parent=47 // pred_fallthru
          _
        // Predicated region
        $region53: #{tpu_custom_call.1} parent=47 // pred_check
          %p400 = pneg %p96
        $region54: #{tpu_custom_call.1} parent=47 // pred_check_branch
          %402 = sbr.rel (%p400) target = $region56
        $region55: #{tpu_custom_call.1} parent=47 // pred_region
          %s403 = sand.u32 %s27, 1
          %s404 = scalar_lea.sflag [#allocation11], %s403
          %s405 = sand.u32 %s86, 1
          %s406 = smul.addr %s405, 8
          %s407 = scalar_lea.vmem [#allocation10], %s406
          %s409 = ssub.s32 128, 128
          %410 = vsyncadd %s404, %s409
          %s411 = sadd.s32 %s36, %s34
          %s412 = smul.addr %s411, 128
          %s413 = scalar_lea.hbm %s1, %s412
          %s415 = sshll.u32 %s407, 4
          %s416 = int_to_ptr.vmem [resolvable:$true] %s415
          %418 = dma.hbm_to_vmem [thread:$0]  %s413, 128, %s416, %s404
        $region56: #{tpu_custom_call.1} parent=47 // pred_fallthru
          _
      $region48: #{tpu_custom_call.1} parent=5 // pred_fallthru
        _
      %p419 = scmp.le.s32.totalorder 1, %s27
      %p420 = scmp.lt.s32.totalorder %s27, 3
      %p421 = pnand %p419, %p420
      %p422 = pneg %p421
      // Predicated region
      $region57: #{tpu_custom_call.1} parent=5 // pred_check
        _
      $region58: #{tpu_custom_call.1} parent=5 // pred_check_branch
        %424 = sbr.rel (%p421) target = $region60
      $region59: #{tpu_custom_call.1} parent=5 // pred_region
        %s425 = ssub.s32 %s27, 1
        %s426 = sand.u32 %s61, 1
        %s427 = scalar_lea.sflag [#allocation8], %s426
        %s428 = sand.u32 %s61, 1
        %s429 = smul.addr %s428, 8
        %s430 = scalar_lea.vmem [#allocation7], %s429
        // Predicated region
        $region61: #{tpu_custom_call.1} parent=59 // pred_check
          %p431 = pneg %p74
        $region62: #{tpu_custom_call.1} parent=59 // pred_check_branch
          %433 = sbr.rel (%p431) target = $region64
        $region63: #{tpu_custom_call.1} parent=59 // pred_region
          %434 = dma.done %s427, 128
        $region64: #{tpu_custom_call.1} parent=59 // pred_fallthru
          _
        %s435 = sand.u32 %s32, 1
        %s436 = scalar_lea.sflag [#allocation11], %s435
        %s437 = sand.u32 %s89, 1
        %s438 = smul.addr %s437, 8
        %s439 = scalar_lea.vmem [#allocation10], %s438
        // Predicated region
        $region65: #{tpu_custom_call.1} parent=59 // pred_check
          %p440 = pneg %p102
        $region66: #{tpu_custom_call.1} parent=59 // pred_check_branch
          %442 = sbr.rel (%p440) target = $region68
        $region67: #{tpu_custom_call.1} parent=59 // pred_region
          %443 = dma.done %s436, 128
        $region68: #{tpu_custom_call.1} parent=59 // pred_fallthru
          _
        // Predicated region
        $region69: #{tpu_custom_call.1} parent=59 // pred_check
          %p444 = pneg %p123
        $region70: #{tpu_custom_call.1} parent=59 // pred_check_branch
          %446 = sbr.rel (%p444) target = $region72
        $region71: #{tpu_custom_call.1} parent=59 // pred_region
          %447 = dma.done [#allocation11], 512
        $region72: #{tpu_custom_call.1} parent=59 // pred_fallthru
          _
        // Predicated region
        $region73: #{tpu_custom_call.1} parent=59 // pred_check
          %p448 = pneg %p144
        $region74: #{tpu_custom_call.1} parent=59 // pred_check_branch
          %450 = sbr.rel (%p448) target = $region76
        $region75: #{tpu_custom_call.1} parent=59 // pred_region
          %451 = dma.done [#allocation14], 512
        $region76: #{tpu_custom_call.1} parent=59 // pred_fallthru
          _
        // Predicated region
        $region77: #{tpu_custom_call.1} parent=59 // pred_check
          %p452 = pneg %p165
        $region78: #{tpu_custom_call.1} parent=59 // pred_check_branch
          %454 = sbr.rel (%p452) target = $region80
        $region79: #{tpu_custom_call.1} parent=59 // pred_region
          %455 = dma.done [#allocation14], 512
        $region80: #{tpu_custom_call.1} parent=59 // pred_fallthru
          _
        // Predicated region
        $region81: #{tpu_custom_call.1} parent=59 // pred_check
          %p456 = pneg %p249
        $region82: #{tpu_custom_call.1} parent=59 // pred_check_branch
          %458 = sbr.rel (%p456) target = $region84
        $region83: #{tpu_custom_call.1} parent=59 // pred_region
          %459 = dma.done [#allocation17], 512
        $region84: #{tpu_custom_call.1} parent=59 // pred_fallthru
          _
        %s460 = sand.u32 %s61, 1
        %s461 = scalar_lea.sflag [#allocation8], %s460
        %s462 = sand.u32 %s61, 1
        %s463 = smul.addr %s462, 8
        %s464 = scalar_lea.vmem [#allocation7], %s463
        %p465 = pneg %p74
        %p466 = pneg %p71
        %s467 = sand.u32 %s32, 1
        %s468 = scalar_lea.sflag [#allocation11], %s467
        %s469 = sand.u32 %s89, 1
        %s470 = smul.addr %s469, 8
        %s471 = scalar_lea.vmem [#allocation10], %s470
        %p472 = pneg %p102
        %p473 = pneg %p99
        %p474 = pneg %p123
        %p475 = pneg %p120
        %p476 = pneg %p144
        %p477 = pneg %p141
        %p478 = pneg %p165
        %p479 = pneg %p162
        %p480 = pneg %p186
        %p481 = pneg %p183
        %p482 = pneg %p207
        %p483 = pneg %p204
        %p484 = pneg %p228
        %p485 = pneg %p225
        %p486 = pneg %p249
        %p487 = pneg %p246
        %p488 = pneg %p270
        %p489 = pneg %p267
        %p490 = pneg %p298
        %p491 = pneg %p295
        %s492 = sand.u32 %s285, 1
        %s493 = scalar_lea.sflag [#allocation9], %s492
        %s494 = sand.u32 %s285, 1
        %s495 = smul.addr %s494, 8
        %s496 = scalar_lea.vmem [#allocation18], %s495
        %p497 = scmp.eq.s32.totalorder %s39, 0
        // Predicated region
        $region85: #{tpu_custom_call.1} parent=59 // pred_check
          %p498 = pneg %p497
        $region86: #{tpu_custom_call.1} parent=59 // pred_check_branch
          %500 = sbr.rel (%p498) target = $region88
        $region87: #{tpu_custom_call.1} parent=59 // pred_region
          %v501 = vld [vmem:[%s430] sm:$0xff]
          %v502 = vld [vmem:[#allocation12] sm:$0xff]
          %v503 = vld [vmem:[#allocation12 + $0x8] sm:$0xff]
          %v504 = vld [vmem:[#allocation12 + $0x10] sm:$0xff]
          %v505 = vld [vmem:[#allocation12 + $0x18] sm:$0xff]
          %v506 = vld [vmem:[%s5] sm:$0x1]
          %v508 = vlaneseq
          %v509 = vshrl.u32 %v508, 7
          %v510 = vsub.s32 0, %v509
          %v511 = vrot.slane %v506, %v510
          %vm513 = vcmask 261120
          %v515 = vsel %vm513, %v501, 0
          %517 = vmatprep.subr.mxu0 0.0
          %518 = vmatpush1.msra.mxu0 %v502
          %519 = vmatprep.subr.mxu0 0.0
          %520 = vmatpush1.msra.mxu0 %v503
          %521 = vmatprep.subr.mxu0 0.0
          %522 = vmatpush1.msra.mxu0 %v504
          %523 = vmatprep.subr.mxu0 0.0
          %524 = vmatpush1.msra.mxu0 %v505
          %525 = vmatprep.subr.mxu0 0.0
          %526 = vmatpush1.msra.mxu0 0.0
          %527 = vmatprep.subr.mxu0 0.0
          %528 = vmatpush1.msra.mxu0 0.0
          %529 = vmatprep.subr.mxu0 0.0
          %530 = vmatpush1.msra.mxu0 0.0
          %531 = vmatprep.subr.mxu0 0.0
          %532 = vmatpush1.msra.mxu0 0.0
          %533 = vmatprep.subr.mxu0 0.0
          %534 = vmatpush1.msra.mxu0 0.0
          %535 = vmatprep.subr.mxu0 0.0
          %536 = vmatpush1.msra.mxu0 0.0
          %537 = vmatprep.subr.mxu0 0.0
          %538 = vmatpush1.msra.mxu0 0.0
          %539 = vmatprep.subr.mxu0 0.0
          %540 = vmatpush1.msra.mxu0 0.0
          %541 = vmatprep.subr.mxu0 0.0
          %542 = vmatpush1.msra.mxu0 0.0
          %543 = vmatprep.subr.mxu0 0.0
          %544 = vmatpush1.msra.mxu0 0.0
          %545 = vmatprep.subr.mxu0 0.0
          %546 = vmatpush1.msra.mxu0 0.0
          %547 = vmatprep.subr.mxu0 0.0
          %548 = vmatpush1.msra.mxu0 0.0
          %549 = vmatprep.subr.mxu0 0.0
          %550 = vmatpush1.msra.mxu0 0.0
          %551 = vmatprep.subr.mxu0 0.0
          %552 = vmatpush1.msra.mxu0 0.0
          %553 = vmatprep.subr.mxu0 0.0
          %554 = vmatpush1.msra.mxu0 0.0
          %555 = vmatprep.subr.mxu0 0.0
          %556 = vmatpush1.msra.mxu0 0.0
          %557 = vmatprep.subr.mxu0 0.0
          %558 = vmatpush1.msra.mxu0 0.0
          %559 = vmatprep.subr.mxu0 0.0
          %560 = vmatpush1.msra.mxu0 0.0
          %561 = vmatprep.subr.mxu0 0.0
          %562 = vmatpush1.msra.mxu0 0.0
          %563 = vmatprep.subr.mxu0 0.0
          %564 = vmatpush1.msra.mxu0 0.0
          %565 = vmatprep.subr.mxu0 0.0
          %566 = vmatpush1.msra.mxu0 0.0
          %567 = vmatprep.subr.mxu0 0.0
          %568 = vmatpush1.msra.mxu0 0.0
          %569 = vmatprep.subr.mxu0 0.0
          %570 = vmatpush1.msra.mxu0 0.0
          %571 = vmatprep.subr.mxu0 0.0
          %572 = vmatpush1.msra.mxu0 0.0
          %573 = vmatprep.subr.mxu0 0.0
          %574 = vmatpush1.msra.mxu0 0.0
          %575 = vmatprep.subr.mxu0 0.0
          %576 = vmatpush1.msra.mxu0 0.0
          %577 = vmatprep.subr.mxu0 0.0
          %578 = vmatpush1.msra.mxu0 0.0
          %579 = vmatprep.subr.mxu0 0.0
          %580 = vmatpush1.msra.mxu0 0.0
          %581 = vmatprep.mubr.f32.mxu0 0.0
          %582 = vmatmul.mubr.f32.gmra.mrb[0].mxu0 %v515
          %v583 = vpop.f32.mrb[0].mxu0
          %v584 = vadd.f32 %v511, %v583
          %v585 = vpop.f32.mrb[0].mxu0
          %586 = vdwg.mxu0
          %vm587 = vcmask 64512
          %588 = vst.msk [vmem:[#allocation2] sm:$0xff] %vm587, %v584
          %590 = vrot.lane.b32.xlu0 %v584, 120
          %v591 = vpop.permute.xlu0 %590
          %s593 = scalar_lea.vmem [#allocation2], 8
          %594 = vst.msk [vmem:[%s593] sm:$0xff] %vm587, %v591
          %595 = vrot.lane.b32.xlu0 %v584, 112
          %v596 = vpop.permute.xlu0 %595
          %s598 = scalar_lea.vmem [#allocation2], 16
          %599 = vst.msk [vmem:[%s598] sm:$0xff] %vm587, %v596
          %600 = vrot.lane.b32.xlu0 %v584, 104
          %v601 = vpop.permute.xlu0 %600
          %s603 = scalar_lea.vmem [#allocation2], 24
          %604 = vst.msk [vmem:[%s603] sm:$0xff] %vm587, %v601
          %vm605 = vcmask 7168
          %606 = vst.msk [vmem:[#allocation3] sm:$0xff] %vm605, -1e+30
          %607 = vst.msk [vmem:[#allocation3 + $0x8] sm:$0xff] %vm605, -1e+30
          %608 = vst.msk [vmem:[#allocation3 + $0x10] sm:$0xff] %vm605, -1e+30
          %609 = vst.msk [vmem:[#allocation3 + $0x18] sm:$0xff] %vm605, -1e+30
          %610 = vst.msk [vmem:[#allocation4] sm:$0xff] %vm605, 0.0
          %611 = vst.msk [vmem:[#allocation4 + $0x8] sm:$0xff] %vm605, 0.0
          %612 = vst.msk [vmem:[#allocation4 + $0x10] sm:$0xff] %vm605, 0.0
          %613 = vst.msk [vmem:[#allocation4 + $0x18] sm:$0xff] %vm605, 0.0
          %614 = vst.msk [vmem:[#allocation5] sm:$0xff] %vm587, 0.0
          %615 = vst.msk [vmem:[#allocation5 + $0x8] sm:$0xff] %vm587, 0.0
          %616 = vst.msk [vmem:[#allocation5 + $0x10] sm:$0xff] %vm587, 0.0
          %617 = vst.msk [vmem:[#allocation5 + $0x18] sm:$0xff] %vm587, 0.0
        $region88: #{tpu_custom_call.1} parent=59 // pred_fallthru
          _
        %s618 = smul.u32 %s39, 8
        %s619 = smul.u32 %s38, 8
        %s620 = sadd.s32 %s619, 7
        %p621 = scmp.le.s32.totalorder %s618, %s620
        // Predicated region
        $region89: #{tpu_custom_call.1} parent=59 // pred_check
          %p622 = pneg %p621
        $region90: #{tpu_custom_call.1} parent=59 // pred_check_branch
          %624 = sbr.rel (%p622) target = $region92
        $region91: #{tpu_custom_call.1} parent=59 // pred_region
          %v625 = vld [vmem:[%s439] sm:$0xff]
          %v626 = vld [vmem:[#allocation13] sm:$0xff]
          %v627 = vld [vmem:[#allocation13 + $0x8] sm:$0xff]
          %v628 = vld [vmem:[#allocation13 + $0x10] sm:$0xff]
          %v629 = vld [vmem:[#allocation13 + $0x18] sm:$0xff]
          %v630 = vld [vmem:[%s6] sm:$0x1]
          %v632 = vlaneseq
          %v633 = vshrl.u32 %v632, 7
          %v634 = vsub.s32 0, %v633
          %v635 = vrot.slane %v630, %v634
          %vm637 = vcmask 261120
          %v639 = vsel %vm637, %v625, 0
          %641 = vmatprep.subr.mxu0 0.0
          %642 = vmatpush1.msra.mxu0 %v626
          %643 = vmatprep.subr.mxu0 0.0
          %644 = vmatpush1.msra.mxu0 %v627
          %645 = vmatprep.subr.mxu0 0.0
          %646 = vmatpush1.msra.mxu0 %v628
          %647 = vmatprep.subr.mxu0 0.0
          %648 = vmatpush1.msra.mxu0 %v629
          %649 = vmatprep.subr.mxu0 0.0
          %650 = vmatpush1.msra.mxu0 0.0
          %651 = vmatprep.subr.mxu0 0.0
          %652 = vmatpush1.msra.mxu0 0.0
          %653 = vmatprep.subr.mxu0 0.0
          %654 = vmatpush1.msra.mxu0 0.0
          %655 = vmatprep.subr.mxu0 0.0
          %656 = vmatpush1.msra.mxu0 0.0
          %657 = vmatprep.subr.mxu0 0.0
          %658 = vmatpush1.msra.mxu0 0.0
          %659 = vmatprep.subr.mxu0 0.0
          %660 = vmatpush1.msra.mxu0 0.0
          %661 = vmatprep.subr.mxu0 0.0
          %662 = vmatpush1.msra.mxu0 0.0
          %663 = vmatprep.subr.mxu0 0.0
          %664 = vmatpush1.msra.mxu0 0.0
          %665 = vmatprep.subr.mxu0 0.0
          %666 = vmatpush1.msra.mxu0 0.0
          %667 = vmatprep.subr.mxu0 0.0
          %668 = vmatpush1.msra.mxu0 0.0
          %669 = vmatprep.subr.mxu0 0.0
          %670 = vmatpush1.msra.mxu0 0.0
          %671 = vmatprep.subr.mxu0 0.0
          %672 = vmatpush1.msra.mxu0 0.0
          %673 = vmatprep.subr.mxu0 0.0
          %674 = vmatpush1.msra.mxu0 0.0
          %675 = vmatprep.subr.mxu0 0.0
          %676 = vmatpush1.msra.mxu0 0.0
          %677 = vmatprep.subr.mxu0 0.0
          %678 = vmatpush1.msra.mxu0 0.0
          %679 = vmatprep.subr.mxu0 0.0
          %680 = vmatpush1.msra.mxu0 0.0
          %681 = vmatprep.subr.mxu0 0.0
          %682 = vmatpush1.msra.mxu0 0.0
          %683 = vmatprep.subr.mxu0 0.0
          %684 = vmatpush1.msra.mxu0 0.0
          %685 = vmatprep.subr.mxu0 0.0
          %686 = vmatpush1.msra.mxu0 0.0
          %687 = vmatprep.subr.mxu0 0.0
          %688 = vmatpush1.msra.mxu0 0.0
          %689 = vmatprep.subr.mxu0 0.0
          %690 = vmatpush1.msra.mxu0 0.0
          %691 = vmatprep.subr.mxu0 0.0
          %692 = vmatpush1.msra.mxu0 0.0
          %693 = vmatprep.subr.mxu0 0.0
          %694 = vmatpush1.msra.mxu0 0.0
          %695 = vmatprep.subr.mxu0 0.0
          %696 = vmatpush1.msra.mxu0 0.0
          %697 = vmatprep.subr.mxu0 0.0
          %698 = vmatpush1.msra.mxu0 0.0
          %699 = vmatprep.subr.mxu0 0.0
          %700 = vmatpush1.msra.mxu0 0.0
          %701 = vmatprep.subr.mxu0 0.0
          %702 = vmatpush1.msra.mxu0 0.0
          %703 = vmatprep.subr.mxu0 0.0
          %704 = vmatpush1.msra.mxu0 0.0
          %705 = vmatprep.mubr.f32.mxu0 0.0
          %706 = vmatmul.mubr.f32.gmra.mrb[0].mxu0 %v639
          %v707 = vpop.f32.mrb[0].mxu0
          %v708 = vadd.f32 %v635, %v707
          %v709 = vpop.f32.mrb[0].mxu0
          %710 = vdwg.mxu0
          %v711 = vld [vmem:[#allocation15] sm:$0xff]
          %v712 = vld [vmem:[#allocation15 + $0x8] sm:$0xff]
          %v713 = vld [vmem:[#allocation15 + $0x10] sm:$0xff]
          %v714 = vld [vmem:[#allocation15 + $0x18] sm:$0xff]
          %v715 = vld [vmem:[%s7] sm:$0x1]
          %v717 = vlaneseq
          %v718 = vshrl.u32 %v717, 7
          %v719 = vsub.s32 0, %v718
          %v720 = vrot.slane %v715, %v719
          %722 = vmatprep.subr.mxu0 0.0
          %723 = vmatpush1.msra.mxu0 %v711
          %724 = vmatprep.subr.mxu0 0.0
          %725 = vmatpush1.msra.mxu0 %v712
          %726 = vmatprep.subr.mxu0 0.0
          %727 = vmatpush1.msra.mxu0 %v713
          %728 = vmatprep.subr.mxu0 0.0
          %729 = vmatpush1.msra.mxu0 %v714
          %730 = vmatprep.subr.mxu0 0.0
          %731 = vmatpush1.msra.mxu0 0.0
          %732 = vmatprep.subr.mxu0 0.0
          %733 = vmatpush1.msra.mxu0 0.0
          %734 = vmatprep.subr.mxu0 0.0
          %735 = vmatpush1.msra.mxu0 0.0
          %736 = vmatprep.subr.mxu0 0.0
          %737 = vmatpush1.msra.mxu0 0.0
          %738 = vmatprep.subr.mxu0 0.0
          %739 = vmatpush1.msra.mxu0 0.0
          %740 = vmatprep.subr.mxu0 0.0
          %741 = vmatpush1.msra.mxu0 0.0
          %742 = vmatprep.subr.mxu0 0.0
          %743 = vmatpush1.msra.mxu0 0.0
          %744 = vmatprep.subr.mxu0 0.0
          %745 = vmatpush1.msra.mxu0 0.0
          %746 = vmatprep.subr.mxu0 0.0
          %747 = vmatpush1.msra.mxu0 0.0
          %748 = vmatprep.subr.mxu0 0.0
          %749 = vmatpush1.msra.mxu0 0.0
          %750 = vmatprep.subr.mxu0 0.0
          %751 = vmatpush1.msra.mxu0 0.0
          %752 = vmatprep.subr.mxu0 0.0
          %753 = vmatpush1.msra.mxu0 0.0
          %754 = vmatprep.subr.mxu0 0.0
          %755 = vmatpush1.msra.mxu0 0.0
          %756 = vmatprep.subr.mxu0 0.0
          %757 = vmatpush1.msra.mxu0 0.0
          %758 = vmatprep.subr.mxu0 0.0
          %759 = vmatpush1.msra.mxu0 0.0
          %760 = vmatprep.subr.mxu0 0.0
          %761 = vmatpush1.msra.mxu0 0.0
          %762 = vmatprep.subr.mxu0 0.0
          %763 = vmatpush1.msra.mxu0 0.0
          %764 = vmatprep.subr.mxu0 0.0
          %765 = vmatpush1.msra.mxu0 0.0
          %766 = vmatprep.subr.mxu0 0.0
          %767 = vmatpush1.msra.mxu0 0.0
          %768 = vmatprep.subr.mxu0 0.0
          %769 = vmatpush1.msra.mxu0 0.0
          %770 = vmatprep.subr.mxu0 0.0
          %771 = vmatpush1.msra.mxu0 0.0
          %772 = vmatprep.subr.mxu0 0.0
          %773 = vmatpush1.msra.mxu0 0.0
          %774 = vmatprep.subr.mxu0 0.0
          %775 = vmatpush1.msra.mxu0 0.0
          %776 = vmatprep.subr.mxu0 0.0
          %777 = vmatpush1.msra.mxu0 0.0
          %778 = vmatprep.subr.mxu0 0.0
          %779 = vmatpush1.msra.mxu0 0.0
          %780 = vmatprep.subr.mxu0 0.0
          %781 = vmatpush1.msra.mxu0 0.0
          %782 = vmatprep.subr.mxu0 0.0
          %783 = vmatpush1.msra.mxu0 0.0
          %784 = vmatprep.subr.mxu0 0.0
          %785 = vmatpush1.msra.mxu0 0.0
          %786 = vmatprep.mubr.f32.mxu0 0.0
          %787 = vmatmul.mubr.f32.gmra.mrb[0].mxu0 %v639
          %v788 = vpop.f32.mrb[0].mxu0
          %v789 = vadd.f32 %v720, %v788
          %v790 = vpop.f32.mrb[0].mxu0
          %791 = vdwg.mxu0
          %v792 = vlaneseq
          %v793 = vshrl.u32 %v792, 7
          %v794 = vstv %s619
          %v795 = vadd.s32 %v794, %v793
          %v796 = vlaneseq
          %v797 = vand.u32 %v796, 127
          %v798 = vstv %s618
          %v799 = vadd.s32 %v798, %v797
          %vm800 = vcmp.ge.s32.totalorder %v795, %v799
          %v801 = vsel %vm800, 0.0, -1e+30
          %v802 = vld [vmem:[#allocation2] sm:$0xff]
          %vm803 = vcmask 64512
          %v805 = vsel %vm803, %v802, 0
          %v808 = vsel %vm803, %v708, 0
          %810 = vmatprep.subr.mxu0 0.0
          %811 = vmatpush1.xpose.msra.mxu0 %v808
          %812 = vmatprep.subr.mxu0 0.0
          %813 = vmatpush1.xpose.msra.mxu0 0.0
          %814 = vmatprep.subr.mxu0 0.0
          %815 = vmatpush1.xpose.msra.mxu0 0.0
          %816 = vmatprep.subr.mxu0 0.0
          %817 = vmatpush1.xpose.msra.mxu0 0.0
          %818 = vmatprep.subr.mxu0 0.0
          %819 = vmatpush1.xpose.msra.mxu0 0.0
          %820 = vmatprep.subr.mxu0 0.0
          %821 = vmatpush1.xpose.msra.mxu0 0.0
          %822 = vmatprep.subr.mxu0 0.0
          %823 = vmatpush1.xpose.msra.mxu0 0.0
          %824 = vmatprep.subr.mxu0 0.0
          %825 = vmatpush1.xpose.msra.mxu0 0.0
          %826 = vmatprep.subr.mxu0 0.0
          %827 = vmatpush1.xpose.msra.mxu0 0.0
          %828 = vmatprep.subr.mxu0 0.0
          %829 = vmatpush1.xpose.msra.mxu0 0.0
          %830 = vmatprep.subr.mxu0 0.0
          %831 = vmatpush1.xpose.msra.mxu0 0.0
          %832 = vmatprep.subr.mxu0 0.0
          %833 = vmatpush1.xpose.msra.mxu0 0.0
          %834 = vmatprep.subr.mxu0 0.0
          %835 = vmatpush1.xpose.msra.mxu0 0.0
          %836 = vmatprep.subr.mxu0 0.0
          %837 = vmatpush1.xpose.msra.mxu0 0.0
          %838 = vmatprep.subr.mxu0 0.0
          %839 = vmatpush1.xpose.msra.mxu0 0.0
          %840 = vmatprep.subr.mxu0 0.0
          %841 = vmatpush1.xpose.msra.mxu0 0.0
          %842 = vmatprep.subr.mxu0 0.0
          %843 = vmatpush1.xpose.msra.mxu0 0.0
          %844 = vmatprep.subr.mxu0 0.0
          %845 = vmatpush1.xpose.msra.mxu0 0.0
          %846 = vmatprep.subr.mxu0 0.0
          %847 = vmatpush1.xpose.msra.mxu0 0.0
          %848 = vmatprep.subr.mxu0 0.0
          %849 = vmatpush1.xpose.msra.mxu0 0.0
          %850 = vmatprep.subr.mxu0 0.0
          %851 = vmatpush1.xpose.msra.mxu0 0.0
          %852 = vmatprep.subr.mxu0 0.0
          %853 = vmatpush1.xpose.msra.mxu0 0.0
          %854 = vmatprep.subr.mxu0 0.0
          %855 = vmatpush1.xpose.msra.mxu0 0.0
          %856 = vmatprep.subr.mxu0 0.0
          %857 = vmatpush1.xpose.msra.mxu0 0.0
          %858 = vmatprep.subr.mxu0 0.0
          %859 = vmatpush1.xpose.msra.mxu0 0.0
          %860 = vmatprep.subr.mxu0 0.0
          %861 = vmatpush1.xpose.msra.mxu0 0.0
          %862 = vmatprep.subr.mxu0 0.0
          %863 = vmatpush1.xpose.msra.mxu0 0.0
          %864 = vmatprep.subr.mxu0 0.0
          %865 = vmatpush1.xpose.msra.mxu0 0.0
          %866 = vmatprep.subr.mxu0 0.0
          %867 = vmatpush1.xpose.msra.mxu0 0.0
          %868 = vmatprep.subr.mxu0 0.0
          %869 = vmatpush1.xpose.msra.mxu0 0.0
          %870 = vmatprep.subr.mxu0 0.0
          %871 = vmatpush1.xpose.msra.mxu0 0.0
          %872 = vmatprep.subr.mxu0 0.0
          %873 = vmatpush1.xpose.msra.mxu0 0.0
          %874 = vmatprep.mubr.f32.mxu0 0.0
          %875 = vmatmul.mubr.f32.gmra.mrb[0].mxu0 %v805
          %v876 = vpop.f32.mrb[0].mxu0
          %v877 = vadd.f32 %v801, %v876
          %v878 = vpop.f32.mrb[0].mxu0
          %879 = vdwg.mxu0
          %v880 = vld [vmem:[#allocation3] sm:$0xff]
          %v881 = vsel %vm803, %v877, -inf
          %882 = vmax.xlane.f32.xlu0 %v881
          %v883 = vpop.xlane.xlu0 %882
          %v884 = vmax.f32 %v880, %v883
          %v885 = vsub.f32 %v880, %v884
          %v886 = vmul.f32 %v885, 1.442695
          %v887 = vpow.pop %v886
          %889 = vset.pattern.permute.xlu0 0
          %890 = vperm.xlu0 %889, %v884
          %v891 = vpop.permute.xlu0 %890
          %v893 = vsub.f32 %v877, %v891
          %v894 = vmul.f32 %v893, 1.442695
          %v895 = vpow.pop %v894
          %v896 = vld [vmem:[#allocation4] sm:$0xff]
          %v897 = vmul.f32 %v887, %v896
          %v898 = vsel %vm803, %v895, 0.0
          %899 = vadd.xlane.f32.xlu0 %v898
          %v900 = vpop.xlane.xlu0 %899
          %v901 = vadd.f32 %v897, %v900
          %vm902 = vcmask 7168
          %903 = vst.msk [vmem:[#allocation4] sm:$0xff] %vm902, %v901
          %v904 = vld [vmem:[#allocation5] sm:$0xff]
          %906 = vset.pattern.permute.xlu0 0
          %907 = vperm.xlu0 %906, %v887
          %v908 = vpop.permute.xlu0 %907
          %v910 = vmul.f32 %v908, %v904
          %v912 = vsel %vm803, %v895, 0
          %914 = vmatprep.subr.mxu0 0.0
          %915 = vmatpush1.msra.mxu0 %v789
          %916 = vmatprep.subr.mxu0 0.0
          %917 = vmatpush1.msra.mxu0 0.0
          %918 = vmatprep.subr.mxu0 0.0
          %919 = vmatpush1.msra.mxu0 0.0
          %920 = vmatprep.subr.mxu0 0.0
          %921 = vmatpush1.msra.mxu0 0.0
          %922 = vmatprep.subr.mxu0 0.0
          %923 = vmatpush1.msra.mxu0 0.0
          %924 = vmatprep.subr.mxu0 0.0
          %925 = vmatpush1.msra.mxu0 0.0
          %926 = vmatprep.subr.mxu0 0.0
          %927 = vmatpush1.msra.mxu0 0.0
          %928 = vmatprep.subr.mxu0 0.0
          %929 = vmatpush1.msra.mxu0 0.0
          %930 = vmatprep.subr.mxu0 0.0
          %931 = vmatpush1.msra.mxu0 0.0
          %932 = vmatprep.subr.mxu0 0.0
          %933 = vmatpush1.msra.mxu0 0.0
          %934 = vmatprep.subr.mxu0 0.0
          %935 = vmatpush1.msra.mxu0 0.0
          %936 = vmatprep.subr.mxu0 0.0
          %937 = vmatpush1.msra.mxu0 0.0
          %938 = vmatprep.subr.mxu0 0.0
          %939 = vmatpush1.msra.mxu0 0.0
          %940 = vmatprep.subr.mxu0 0.0
          %941 = vmatpush1.msra.mxu0 0.0
          %942 = vmatprep.subr.mxu0 0.0
          %943 = vmatpush1.msra.mxu0 0.0
          %944 = vmatprep.subr.mxu0 0.0
          %945 = vmatpush1.msra.mxu0 0.0
          %946 = vmatprep.subr.mxu0 0.0
          %947 = vmatpush1.msra.mxu0 0.0
          %948 = vmatprep.subr.mxu0 0.0
          %949 = vmatpush1.msra.mxu0 0.0
          %950 = vmatprep.subr.mxu0 0.0
          %951 = vmatpush1.msra.mxu0 0.0
          %952 = vmatprep.subr.mxu0 0.0
          %953 = vmatpush1.msra.mxu0 0.0
          %954 = vmatprep.subr.mxu0 0.0
          %955 = vmatpush1.msra.mxu0 0.0
          %956 = vmatprep.subr.mxu0 0.0
          %957 = vmatpush1.msra.mxu0 0.0
          %958 = vmatprep.subr.mxu0 0.0
          %959 = vmatpush1.msra.mxu0 0.0
          %960 = vmatprep.subr.mxu0 0.0
          %961 = vmatpush1.msra.mxu0 0.0
          %962 = vmatprep.subr.mxu0 0.0
          %963 = vmatpush1.msra.mxu0 0.0
          %964 = vmatprep.subr.mxu0 0.0
          %965 = vmatpush1.msra.mxu0 0.0
          %966 = vmatprep.subr.mxu0 0.0
          %967 = vmatpush1.msra.mxu0 0.0
          %968 = vmatprep.subr.mxu0 0.0
          %969 = vmatpush1.msra.mxu0 0.0
          %970 = vmatprep.subr.mxu0 0.0
          %971 = vmatpush1.msra.mxu0 0.0
          %972 = vmatprep.subr.mxu0 0.0
          %973 = vmatpush1.msra.mxu0 0.0
          %974 = vmatprep.subr.mxu0 0.0
          %975 = vmatpush1.msra.mxu0 0.0
          %976 = vmatprep.subr.mxu0 0.0
          %977 = vmatpush1.msra.mxu0 0.0
          %978 = vmatprep.mubr.f32.mxu0 0.0
          %979 = vmatmul.mubr.f32.gmra.mrb[0].mxu0 %v912
          %v980 = vpop.f32.mrb[0].mxu0
          %v981 = vadd.f32 0.0, %v980
          %v982 = vpop.f32.mrb[0].mxu0
          %983 = vdwg.mxu0
          %v984 = vadd.f32 %v910, %v981
          %985 = vst.msk [vmem:[#allocation5] sm:$0xff] %vm803, %v984
          %986 = vst.msk [vmem:[#allocation3] sm:$0xff] %vm902, %v884
          %s987 = scalar_lea.vmem [#allocation2], 8
          %v988 = vld [vmem:[%s987] sm:$0xff]
          %989 = vrot.lane.b32.xlu0 %v708, 120
          %v990 = vpop.permute.xlu0 %989
          %v992 = vsel %vm803, %v988, 0
          %v994 = vsel %vm803, %v990, 0
          %996 = vmatprep.subr.mxu0 0.0
          %997 = vmatpush1.xpose.msra.mxu0 %v994
          %998 = vmatprep.subr.mxu0 0.0
          %999 = vmatpush1.xpose.msra.mxu0 0.0
          %1000 = vmatprep.subr.mxu0 0.0
          %1001 = vmatpush1.xpose.msra.mxu0 0.0
          %1002 = vmatprep.subr.mxu0 0.0
          %1003 = vmatpush1.xpose.msra.mxu0 0.0
          %1004 = vmatprep.subr.mxu0 0.0
          %1005 = vmatpush1.xpose.msra.mxu0 0.0
          %1006 = vmatprep.subr.mxu0 0.0
          %1007 = vmatpush1.xpose.msra.mxu0 0.0
          %1008 = vmatprep.subr.mxu0 0.0
          %1009 = vmatpush1.xpose.msra.mxu0 0.0
          %1010 = vmatprep.subr.mxu0 0.0
          %1011 = vmatpush1.xpose.msra.mxu0 0.0
          %1012 = vmatprep.subr.mxu0 0.0
          %1013 = vmatpush1.xpose.msra.mxu0 0.0
          %1014 = vmatprep.subr.mxu0 0.0
          %1015 = vmatpush1.xpose.msra.mxu0 0.0
          %1016 = vmatprep.subr.mxu0 0.0
          %1017 = vmatpush1.xpose.msra.mxu0 0.0
          %1018 = vmatprep.subr.mxu0 0.0
          %1019 = vmatpush1.xpose.msra.mxu0 0.0
          %1020 = vmatprep.subr.mxu0 0.0
          %1021 = vmatpush1.xpose.msra.mxu0 0.0
          %1022 = vmatprep.subr.mxu0 0.0
          %1023 = vmatpush1.xpose.msra.mxu0 0.0
          %1024 = vmatprep.subr.mxu0 0.0
          %1025 = vmatpush1.xpose.msra.mxu0 0.0
          %1026 = vmatprep.subr.mxu0 0.0
          %1027 = vmatpush1.xpose.msra.mxu0 0.0
          %1028 = vmatprep.subr.mxu0 0.0
          %1029 = vmatpush1.xpose.msra.mxu0 0.0
          %1030 = vmatprep.subr.mxu0 0.0
          %1031 = vmatpush1.xpose.msra.mxu0 0.0
          %1032 = vmatprep.subr.mxu0 0.0
          %1033 = vmatpush1.xpose.msra.mxu0 0.0
          %1034 = vmatprep.subr.mxu0 0.0
          %1035 = vmatpush1.xpose.msra.mxu0 0.0
          %1036 = vmatprep.subr.mxu0 0.0
          %1037 = vmatpush1.xpose.msra.mxu0 0.0
          %1038 = vmatprep.subr.mxu0 0.0
          %1039 = vmatpush1.xpose.msra.mxu0 0.0
          %1040 = vmatprep.subr.mxu0 0.0
          %1041 = vmatpush1.xpose.msra.mxu0 0.0
          %1042 = vmatprep.subr.mxu0 0.0
          %1043 = vmatpush1.xpose.msra.mxu0 0.0
          %1044 = vmatprep.subr.mxu0 0.0
          %1045 = vmatpush1.xpose.msra.mxu0 0.0
          %1046 = vmatprep.subr.mxu0 0.0
          %1047 = vmatpush1.xpose.msra.mxu0 0.0
          %1048 = vmatprep.subr.mxu0 0.0
          %1049 = vmatpush1.xpose.msra.mxu0 0.0
          %1050 = vmatprep.subr.mxu0 0.0
          %1051 = vmatpush1.xpose.msra.mxu0 0.0
          %1052 = vmatprep.subr.mxu0 0.0
          %1053 = vmatpush1.xpose.msra.mxu0 0.0
          %1054 = vmatprep.subr.mxu0 0.0
          %1055 = vmatpush1.xpose.msra.mxu0 0.0
          %1056 = vmatprep.subr.mxu0 0.0
          %1057 = vmatpush1.xpose.msra.mxu0 0.0
          %1058 = vmatprep.subr.mxu0 0.0
          %1059 = vmatpush1.xpose.msra.mxu0 0.0
          %1060 = vmatprep.mubr.f32.mxu0 0.0
          %1061 = vmatmul.mubr.f32.gmra.mrb[0].mxu0 %v992
          %v1062 = vpop.f32.mrb[0].mxu0
          %v1063 = vadd.f32 %v801, %v1062
          %v1064 = vpop.f32.mrb[0].mxu0
          %1065 = vdwg.mxu0
          %s1066 = scalar_lea.vmem [#allocation3], 8
          %v1067 = vld [vmem:[%s1066] sm:$0xff]
          %v1068 = vsel %vm803, %v1063, -inf
          %1069 = vmax.xlane.f32.xlu0 %v1068
          %v1070 = vpop.xlane.xlu0 %1069
          %v1071 = vmax.f32 %v1067, %v1070
          %v1072 = vsub.f32 %v1067, %v1071
          %v1073 = vmul.f32 %v1072, 1.442695
          %v1074 = vpow.pop %v1073
          %1076 = vset.pattern.permute.xlu0 0
          %1077 = vperm.xlu0 %1076, %v1071
          %v1078 = vpop.permute.xlu0 %1077
          %v1080 = vsub.f32 %v1063, %v1078
          %v1081 = vmul.f32 %v1080, 1.442695
          %v1082 = vpow.pop %v1081
          %s1083 = scalar_lea.vmem [#allocation4], 8
          %v1084 = vld [vmem:[%s1083] sm:$0xff]
          %v1085 = vmul.f32 %v1074, %v1084
          %v1086 = vsel %vm803, %v1082, 0.0
          %1087 = vadd.xlane.f32.xlu0 %v1086
          %v1088 = vpop.xlane.xlu0 %1087
          %v1089 = vadd.f32 %v1085, %v1088
          %1090 = vst.msk [vmem:[%s1083] sm:$0xff] %vm902, %v1089
          %s1091 = scalar_lea.vmem [#allocation5], 8
          %v1092 = vld [vmem:[%s1091] sm:$0xff]
          %1094 = vset.pattern.permute.xlu0 0
          %1095 = vperm.xlu0 %1094, %v1074
          %v1096 = vpop.permute.xlu0 %1095
          %v1098 = vmul.f32 %v1096, %v1092
          %1100 = vrot.lane.b32.xlu0 %v789, 120
          %v1101 = vpop.permute.xlu0 %1100
          %v1104 = vsel %vm803, %v1082, 0
          %1106 = vmatprep.subr.mxu0 0.0
          %1107 = vmatpush1.msra.mxu0 %v1101
          %1108 = vmatprep.subr.mxu0 0.0
          %1109 = vmatpush1.msra.mxu0 0.0
          %1110 = vmatprep.subr.mxu0 0.0
          %1111 = vmatpush1.msra.mxu0 0.0
          %1112 = vmatprep.subr.mxu0 0.0
          %1113 = vmatpush1.msra.mxu0 0.0
          %1114 = vmatprep.subr.mxu0 0.0
          %1115 = vmatpush1.msra.mxu0 0.0
          %1116 = vmatprep.subr.mxu0 0.0
          %1117 = vmatpush1.msra.mxu0 0.0
          %1118 = vmatprep.subr.mxu0 0.0
          %1119 = vmatpush1.msra.mxu0 0.0
          %1120 = vmatprep.subr.mxu0 0.0
          %1121 = vmatpush1.msra.mxu0 0.0
          %1122 = vmatprep.subr.mxu0 0.0
          %1123 = vmatpush1.msra.mxu0 0.0
          %1124 = vmatprep.subr.mxu0 0.0
          %1125 = vmatpush1.msra.mxu0 0.0
          %1126 = vmatprep.subr.mxu0 0.0
          %1127 = vmatpush1.msra.mxu0 0.0
          %1128 = vmatprep.subr.mxu0 0.0
          %1129 = vmatpush1.msra.mxu0 0.0
          %1130 = vmatprep.subr.mxu0 0.0
          %1131 = vmatpush1.msra.mxu0 0.0
          %1132 = vmatprep.subr.mxu0 0.0
          %1133 = vmatpush1.msra.mxu0 0.0
          %1134 = vmatprep.subr.mxu0 0.0
          %1135 = vmatpush1.msra.mxu0 0.0
          %1136 = vmatprep.subr.mxu0 0.0
          %1137 = vmatpush1.msra.mxu0 0.0
          %1138 = vmatprep.subr.mxu0 0.0
          %1139 = vmatpush1.msra.mxu0 0.0
          %1140 = vmatprep.subr.mxu0 0.0
          %1141 = vmatpush1.msra.mxu0 0.0
          %1142 = vmatprep.subr.mxu0 0.0
          %1143 = vmatpush1.msra.mxu0 0.0
          %1144 = vmatprep.subr.mxu0 0.0
          %1145 = vmatpush1.msra.mxu0 0.0
          %1146 = vmatprep.subr.mxu0 0.0
          %1147 = vmatpush1.msra.mxu0 0.0
          %1148 = vmatprep.subr.mxu0 0.0
          %1149 = vmatpush1.msra.mxu0 0.0
          %1150 = vmatprep.subr.mxu0 0.0
          %1151 = vmatpush1.msra.mxu0 0.0
          %1152 = vmatprep.subr.mxu0 0.0
          %1153 = vmatpush1.msra.mxu0 0.0
          %1154 = vmatprep.subr.mxu0 0.0
          %1155 = vmatpush1.msra.mxu0 0.0
          %1156 = vmatprep.subr.mxu0 0.0
          %1157 = vmatpush1.msra.mxu0 0.0
          %1158 = vmatprep.subr.mxu0 0.0
          %1159 = vmatpush1.msra.mxu0 0.0
          %1160 = vmatprep.subr.mxu0 0.0
          %1161 = vmatpush1.msra.mxu0 0.0
          %1162 = vmatprep.subr.mxu0 0.0
          %1163 = vmatpush1.msra.mxu0 0.0
          %1164 = vmatprep.subr.mxu0 0.0
          %1165 = vmatpush1.msra.mxu0 0.0
          %1166 = vmatprep.subr.mxu0 0.0
          %1167 = vmatpush1.msra.mxu0 0.0
          %1168 = vmatprep.subr.mxu0 0.0
          %1169 = vmatpush1.msra.mxu0 0.0
          %1170 = vmatprep.mubr.f32.mxu0 0.0
          %1171 = vmatmul.mubr.f32.gmra.mrb[0].mxu0 %v1104
          %v1172 = vpop.f32.mrb[0].mxu0
          %v1173 = vadd.f32 0.0, %v1172
          %v1174 = vpop.f32.mrb[0].mxu0
          %1175 = vdwg.mxu0
          %v1176 = vadd.f32 %v1098, %v1173
          %1177 = vst.msk [vmem:[%s1091] sm:$0xff] %vm803, %v1176
          %1178 = vst.msk [vmem:[%s1066] sm:$0xff] %vm902, %v1071
          %s1179 = scalar_lea.vmem [#allocation2], 16
          %v1180 = vld [vmem:[%s1179] sm:$0xff]
          %1181 = vrot.lane.b32.xlu0 %v708, 112
          %v1182 = vpop.permute.xlu0 %1181
          %v1184 = vsel %vm803, %v1180, 0
          %v1186 = vsel %vm803, %v1182, 0
          %1188 = vmatprep.subr.mxu0 0.0
          %1189 = vmatpush1.xpose.msra.mxu0 %v1186
          %1190 = vmatprep.subr.mxu0 0.0
          %1191 = vmatpush1.xpose.msra.mxu0 0.0
          %1192 = vmatprep.subr.mxu0 0.0
          %1193 = vmatpush1.xpose.msra.mxu0 0.0
          %1194 = vmatprep.subr.mxu0 0.0
          %1195 = vmatpush1.xpose.msra.mxu0 0.0
          %1196 = vmatprep.subr.mxu0 0.0
          %1197 = vmatpush1.xpose.msra.mxu0 0.0
          %1198 = vmatprep.subr.mxu0 0.0
          %1199 = vmatpush1.xpose.msra.mxu0 0.0
          %1200 = vmatprep.subr.mxu0 0.0
          %1201 = vmatpush1.xpose.msra.mxu0 0.0
          %1202 = vmatprep.subr.mxu0 0.0
          %1203 = vmatpush1.xpose.msra.mxu0 0.0
          %1204 = vmatprep.subr.mxu0 0.0
          %1205 = vmatpush1.xpose.msra.mxu0 0.0
          %1206 = vmatprep.subr.mxu0 0.0
          %1207 = vmatpush1.xpose.msra.mxu0 0.0
          %1208 = vmatprep.subr.mxu0 0.0
          %1209 = vmatpush1.xpose.msra.mxu0 0.0
          %1210 = vmatprep.subr.mxu0 0.0
          %1211 = vmatpush1.xpose.msra.mxu0 0.0
          %1212 = vmatprep.subr.mxu0 0.0
          %1213 = vmatpush1.xpose.msra.mxu0 0.0
          %1214 = vmatprep.subr.mxu0 0.0
          %1215 = vmatpush1.xpose.msra.mxu0 0.0
          %1216 = vmatprep.subr.mxu0 0.0
          %1217 = vmatpush1.xpose.msra.mxu0 0.0
          %1218 = vmatprep.subr.mxu0 0.0
          %1219 = vmatpush1.xpose.msra.mxu0 0.0
          %1220 = vmatprep.subr.mxu0 0.0
          %1221 = vmatpush1.xpose.msra.mxu0 0.0
          %1222 = vmatprep.subr.mxu0 0.0
          %1223 = vmatpush1.xpose.msra.mxu0 0.0
          %1224 = vmatprep.subr.mxu0 0.0
          %1225 = vmatpush1.xpose.msra.mxu0 0.0
          %1226 = vmatprep.subr.mxu0 0.0
          %1227 = vmatpush1.xpose.msra.mxu0 0.0
          %1228 = vmatprep.subr.mxu0 0.0
          %1229 = vmatpush1.xpose.msra.mxu0 0.0
          %1230 = vmatprep.subr.mxu0 0.0
          %1231 = vmatpush1.xpose.msra.mxu0 0.0
          %1232 = vmatprep.subr.mxu0 0.0
          %1233 = vmatpush1.xpose.msra.mxu0 0.0
          %1234 = vmatprep.subr.mxu0 0.0
          %1235 = vmatpush1.xpose.msra.mxu0 0.0
          %1236 = vmatprep.subr.mxu0 0.0
          %1237 = vmatpush1.xpose.msra.mxu0 0.0
          %1238 = vmatprep.subr.mxu0 0.0
          %1239 = vmatpush1.xpose.msra.mxu0 0.0
          %1240 = vmatprep.subr.mxu0 0.0
          %1241 = vmatpush1.xpose.msra.mxu0 0.0
          %1242 = vmatprep.subr.mxu0 0.0
          %1243 = vmatpush1.xpose.msra.mxu0 0.0
          %1244 = vmatprep.subr.mxu0 0.0
          %1245 = vmatpush1.xpose.msra.mxu0 0.0
          %1246 = vmatprep.subr.mxu0 0.0
          %1247 = vmatpush1.xpose.msra.mxu0 0.0
          %1248 = vmatprep.subr.mxu0 0.0
          %1249 = vmatpush1.xpose.msra.mxu0 0.0
          %1250 = vmatprep.subr.mxu0 0.0
          %1251 = vmatpush1.xpose.msra.mxu0 0.0
          %1252 = vmatprep.mubr.f32.mxu0 0.0
          %1253 = vmatmul.mubr.f32.gmra.mrb[0].mxu0 %v1184
          %v1254 = vpop.f32.mrb[0].mxu0
          %v1255 = vadd.f32 %v801, %v1254
          %v1256 = vpop.f32.mrb[0].mxu0
          %1257 = vdwg.mxu0
          %s1258 = scalar_lea.vmem [#allocation3], 16
          %v1259 = vld [vmem:[%s1258] sm:$0xff]
          %v1260 = vsel %vm803, %v1255, -inf
          %1261 = vmax.xlane.f32.xlu0 %v1260
          %v1262 = vpop.xlane.xlu0 %1261
          %v1263 = vmax.f32 %v1259, %v1262
          %v1264 = vsub.f32 %v1259, %v1263
          %v1265 = vmul.f32 %v1264, 1.442695
          %v1266 = vpow.pop %v1265
          %1268 = vset.pattern.permute.xlu0 0
          %1269 = vperm.xlu0 %1268, %v1263
          %v1270 = vpop.permute.xlu0 %1269
          %v1272 = vsub.f32 %v1255, %v1270
          %v1273 = vmul.f32 %v1272, 1.442695
          %v1274 = vpow.pop %v1273
          %s1275 = scalar_lea.vmem [#allocation4], 16
          %v1276 = vld [vmem:[%s1275] sm:$0xff]
          %v1277 = vmul.f32 %v1266, %v1276
          %v1278 = vsel %vm803, %v1274, 0.0
          %1279 = vadd.xlane.f32.xlu0 %v1278
          %v1280 = vpop.xlane.xlu0 %1279
          %v1281 = vadd.f32 %v1277, %v1280
          %1282 = vst.msk [vmem:[%s1275] sm:$0xff] %vm902, %v1281
          %s1283 = scalar_lea.vmem [#allocation5], 16
          %v1284 = vld [vmem:[%s1283] sm:$0xff]
          %1286 = vset.pattern.permute.xlu0 0
          %1287 = vperm.xlu0 %1286, %v1266
          %v1288 = vpop.permute.xlu0 %1287
          %v1290 = vmul.f32 %v1288, %v1284
          %1291 = vrot.lane.b32.xlu0 %v789, 112
          %v1292 = vpop.permute.xlu0 %1291
          %v1295 = vsel %vm803, %v1274, 0
          %1297 = vmatprep.subr.mxu0 0.0
          %1298 = vmatpush1.msra.mxu0 %v1292
          %1299 = vmatprep.subr.mxu0 0.0
          %1300 = vmatpush1.msra.mxu0 0.0
          %1301 = vmatprep.subr.mxu0 0.0
          %1302 = vmatpush1.msra.mxu0 0.0
          %1303 = vmatprep.subr.mxu0 0.0
          %1304 = vmatpush1.msra.mxu0 0.0
          %1305 = vmatprep.subr.mxu0 0.0
          %1306 = vmatpush1.msra.mxu0 0.0
          %1307 = vmatprep.subr.mxu0 0.0
          %1308 = vmatpush1.msra.mxu0 0.0
          %1309 = vmatprep.subr.mxu0 0.0
          %1310 = vmatpush1.msra.mxu0 0.0
          %1311 = vmatprep.subr.mxu0 0.0
          %1312 = vmatpush1.msra.mxu0 0.0
          %1313 = vmatprep.subr.mxu0 0.0
          %1314 = vmatpush1.msra.mxu0 0.0
          %1315 = vmatprep.subr.mxu0 0.0
          %1316 = vmatpush1.msra.mxu0 0.0
          %1317 = vmatprep.subr.mxu0 0.0
          %1318 = vmatpush1.msra.mxu0 0.0
          %1319 = vmatprep.subr.mxu0 0.0
          %1320 = vmatpush1.msra.mxu0 0.0
          %1321 = vmatprep.subr.mxu0 0.0
          %1322 = vmatpush1.msra.mxu0 0.0
          %1323 = vmatprep.subr.mxu0 0.0
          %1324 = vmatpush1.msra.mxu0 0.0
          %1325 = vmatprep.subr.mxu0 0.0
          %1326 = vmatpush1.msra.mxu0 0.0
          %1327 = vmatprep.subr.mxu0 0.0
          %1328 = vmatpush1.msra.mxu0 0.0
          %1329 = vmatprep.subr.mxu0 0.0
          %1330 = vmatpush1.msra.mxu0 0.0
          %1331 = vmatprep.subr.mxu0 0.0
          %1332 = vmatpush1.msra.mxu0 0.0
          %1333 = vmatprep.subr.mxu0 0.0
          %1334 = vmatpush1.msra.mxu0 0.0
          %1335 = vmatprep.subr.mxu0 0.0
          %1336 = vmatpush1.msra.mxu0 0.0
          %1337 = vmatprep.subr.mxu0 0.0
          %1338 = vmatpush1.msra.mxu0 0.0
          %1339 = vmatprep.subr.mxu0 0.0
          %1340 = vmatpush1.msra.mxu0 0.0
          %1341 = vmatprep.subr.mxu0 0.0
          %1342 = vmatpush1.msra.mxu0 0.0
          %1343 = vmatprep.subr.mxu0 0.0
          %1344 = vmatpush1.msra.mxu0 0.0
          %1345 = vmatprep.subr.mxu0 0.0
          %1346 = vmatpush1.msra.mxu0 0.0
          %1347 = vmatprep.subr.mxu0 0.0
          %1348 = vmatpush1.msra.mxu0 0.0
          %1349 = vmatprep.subr.mxu0 0.0
          %1350 = vmatpush1.msra.mxu0 0.0
          %1351 = vmatprep.subr.mxu0 0.0
          %1352 = vmatpush1.msra.mxu0 0.0
          %1353 = vmatprep.subr.mxu0 0.0
          %1354 = vmatpush1.msra.mxu0 0.0
          %1355 = vmatprep.subr.mxu0 0.0
          %1356 = vmatpush1.msra.mxu0 0.0
          %1357 = vmatprep.subr.mxu0 0.0
          %1358 = vmatpush1.msra.mxu0 0.0
          %1359 = vmatprep.subr.mxu0 0.0
          %1360 = vmatpush1.msra.mxu0 0.0
          %1361 = vmatprep.mubr.f32.mxu0 0.0
          %1362 = vmatmul.mubr.f32.gmra.mrb[0].mxu0 %v1295
          %v1363 = vpop.f32.mrb[0].mxu0
          %v1364 = vadd.f32 0.0, %v1363
          %v1365 = vpop.f32.mrb[0].mxu0
          %1366 = vdwg.mxu0
          %v1367 = vadd.f32 %v1290, %v1364
          %1368 = vst.msk [vmem:[%s1283] sm:$0xff] %vm803, %v1367
          %1369 = vst.msk [vmem:[%s1258] sm:$0xff] %vm902, %v1263
          %s1370 = scalar_lea.vmem [#allocation2], 24
          %v1371 = vld [vmem:[%s1370] sm:$0xff]
          %1372 = vrot.lane.b32.xlu0 %v708, 104
          %v1373 = vpop.permute.xlu0 %1372
          %v1375 = vsel %vm803, %v1371, 0
          %v1377 = vsel %vm803, %v1373, 0
          %1379 = vmatprep.subr.mxu0 0.0
          %1380 = vmatpush1.xpose.msra.mxu0 %v1377
          %1381 = vmatprep.subr.mxu0 0.0
          %1382 = vmatpush1.xpose.msra.mxu0 0.0
          %1383 = vmatprep.subr.mxu0 0.0
          %1384 = vmatpush1.xpose.msra.mxu0 0.0
          %1385 = vmatprep.subr.mxu0 0.0
          %1386 = vmatpush1.xpose.msra.mxu0 0.0
          %1387 = vmatprep.subr.mxu0 0.0
          %1388 = vmatpush1.xpose.msra.mxu0 0.0
          %1389 = vmatprep.subr.mxu0 0.0
          %1390 = vmatpush1.xpose.msra.mxu0 0.0
          %1391 = vmatprep.subr.mxu0 0.0
          %1392 = vmatpush1.xpose.msra.mxu0 0.0
          %1393 = vmatprep.subr.mxu0 0.0
          %1394 = vmatpush1.xpose.msra.mxu0 0.0
          %1395 = vmatprep.subr.mxu0 0.0
          %1396 = vmatpush1.xpose.msra.mxu0 0.0
          %1397 = vmatprep.subr.mxu0 0.0
          %1398 = vmatpush1.xpose.msra.mxu0 0.0
          %1399 = vmatprep.subr.mxu0 0.0
          %1400 = vmatpush1.xpose.msra.mxu0 0.0
          %1401 = vmatprep.subr.mxu0 0.0
          %1402 = vmatpush1.xpose.msra.mxu0 0.0
          %1403 = vmatprep.subr.mxu0 0.0
          %1404 = vmatpush1.xpose.msra.mxu0 0.0
          %1405 = vmatprep.subr.mxu0 0.0
          %1406 = vmatpush1.xpose.msra.mxu0 0.0
          %1407 = vmatprep.subr.mxu0 0.0
          %1408 = vmatpush1.xpose.msra.mxu0 0.0
          %1409 = vmatprep.subr.mxu0 0.0
          %1410 = vmatpush1.xpose.msra.mxu0 0.0
          %1411 = vmatprep.subr.mxu0 0.0
          %1412 = vmatpush1.xpose.msra.mxu0 0.0
          %1413 = vmatprep.subr.mxu0 0.0
          %1414 = vmatpush1.xpose.msra.mxu0 0.0
          %1415 = vmatprep.subr.mxu0 0.0
          %1416 = vmatpush1.xpose.msra.mxu0 0.0
          %1417 = vmatprep.subr.mxu0 0.0
          %1418 = vmatpush1.xpose.msra.mxu0 0.0
          %1419 = vmatprep.subr.mxu0 0.0
          %1420 = vmatpush1.xpose.msra.mxu0 0.0
          %1421 = vmatprep.subr.mxu0 0.0
          %1422 = vmatpush1.xpose.msra.mxu0 0.0
          %1423 = vmatprep.subr.mxu0 0.0
          %1424 = vmatpush1.xpose.msra.mxu0 0.0
          %1425 = vmatprep.subr.mxu0 0.0
          %1426 = vmatpush1.xpose.msra.mxu0 0.0
          %1427 = vmatprep.subr.mxu0 0.0
          %1428 = vmatpush1.xpose.msra.mxu0 0.0
          %1429 = vmatprep.subr.mxu0 0.0
          %1430 = vmatpush1.xpose.msra.mxu0 0.0
          %1431 = vmatprep.subr.mxu0 0.0
          %1432 = vmatpush1.xpose.msra.mxu0 0.0
          %1433 = vmatprep.subr.mxu0 0.0
          %1434 = vmatpush1.xpose.msra.mxu0 0.0
          %1435 = vmatprep.subr.mxu0 0.0
          %1436 = vmatpush1.xpose.msra.mxu0 0.0
          %1437 = vmatprep.subr.mxu0 0.0
          %1438 = vmatpush1.xpose.msra.mxu0 0.0
          %1439 = vmatprep.subr.mxu0 0.0
          %1440 = vmatpush1.xpose.msra.mxu0 0.0
          %1441 = vmatprep.subr.mxu0 0.0
          %1442 = vmatpush1.xpose.msra.mxu0 0.0
          %1443 = vmatprep.mubr.f32.mxu0 0.0
          %1444 = vmatmul.mubr.f32.gmra.mrb[0].mxu0 %v1375
          %v1445 = vpop.f32.mrb[0].mxu0
          %v1446 = vadd.f32 %v801, %v1445
          %v1447 = vpop.f32.mrb[0].mxu0
          %1448 = vdwg.mxu0
          %s1449 = scalar_lea.vmem [#allocation3], 24
          %v1450 = vld [vmem:[%s1449] sm:$0xff]
          %v1451 = vsel %vm803, %v1446, -inf
          %1452 = vmax.xlane.f32.xlu0 %v1451
          %v1453 = vpop.xlane.xlu0 %1452
          %v1454 = vmax.f32 %v1450, %v1453
          %v1455 = vsub.f32 %v1450, %v1454
          %v1456 = vmul.f32 %v1455, 1.442695
          %v1457 = vpow.pop %v1456
          %1459 = vset.pattern.permute.xlu0 0
          %1460 = vperm.xlu0 %1459, %v1454
          %v1461 = vpop.permute.xlu0 %1460
          %v1463 = vsub.f32 %v1446, %v1461
          %v1464 = vmul.f32 %v1463, 1.442695
          %v1465 = vpow.pop %v1464
          %s1466 = scalar_lea.vmem [#allocation4], 24
          %v1467 = vld [vmem:[%s1466] sm:$0xff]
          %v1468 = vmul.f32 %v1457, %v1467
          %v1469 = vsel %vm803, %v1465, 0.0
          %1470 = vadd.xlane.f32.xlu0 %v1469
          %v1471 = vpop.xlane.xlu0 %1470
          %v1472 = vadd.f32 %v1468, %v1471
          %1473 = vst.msk [vmem:[%s1466] sm:$0xff] %vm902, %v1472
          %s1474 = scalar_lea.vmem [#allocation5], 24
          %v1475 = vld [vmem:[%s1474] sm:$0xff]
          %1477 = vset.pattern.permute.xlu0 0
          %1478 = vperm.xlu0 %1477, %v1457
          %v1479 = vpop.permute.xlu0 %1478
          %v1481 = vmul.f32 %v1479, %v1475
          %1482 = vrot.lane.b32.xlu0 %v789, 104
          %v1483 = vpop.permute.xlu0 %1482
          %v1486 = vsel %vm803, %v1465, 0
          %1488 = vmatprep.subr.mxu0 0.0
          %1489 = vmatpush1.msra.mxu0 %v1483
          %1490 = vmatprep.subr.mxu0 0.0
          %1491 = vmatpush1.msra.mxu0 0.0
          %1492 = vmatprep.subr.mxu0 0.0
          %1493 = vmatpush1.msra.mxu0 0.0
          %1494 = vmatprep.subr.mxu0 0.0
          %1495 = vmatpush1.msra.mxu0 0.0
          %1496 = vmatprep.subr.mxu0 0.0
          %1497 = vmatpush1.msra.mxu0 0.0
          %1498 = vmatprep.subr.mxu0 0.0
          %1499 = vmatpush1.msra.mxu0 0.0
          %1500 = vmatprep.subr.mxu0 0.0
          %1501 = vmatpush1.msra.mxu0 0.0
          %1502 = vmatprep.subr.mxu0 0.0
          %1503 = vmatpush1.msra.mxu0 0.0
          %1504 = vmatprep.subr.mxu0 0.0
          %1505 = vmatpush1.msra.mxu0 0.0
          %1506 = vmatprep.subr.mxu0 0.0
          %1507 = vmatpush1.msra.mxu0 0.0
          %1508 = vmatprep.subr.mxu0 0.0
          %1509 = vmatpush1.msra.mxu0 0.0
          %1510 = vmatprep.subr.mxu0 0.0
          %1511 = vmatpush1.msra.mxu0 0.0
          %1512 = vmatprep.subr.mxu0 0.0
          %1513 = vmatpush1.msra.mxu0 0.0
          %1514 = vmatprep.subr.mxu0 0.0
          %1515 = vmatpush1.msra.mxu0 0.0
          %1516 = vmatprep.subr.mxu0 0.0
          %1517 = vmatpush1.msra.mxu0 0.0
          %1518 = vmatprep.subr.mxu0 0.0
          %1519 = vmatpush1.msra.mxu0 0.0
          %1520 = vmatprep.subr.mxu0 0.0
          %1521 = vmatpush1.msra.mxu0 0.0
          %1522 = vmatprep.subr.mxu0 0.0
          %1523 = vmatpush1.msra.mxu0 0.0
          %1524 = vmatprep.subr.mxu0 0.0
          %1525 = vmatpush1.msra.mxu0 0.0
          %1526 = vmatprep.subr.mxu0 0.0
          %1527 = vmatpush1.msra.mxu0 0.0
          %1528 = vmatprep.subr.mxu0 0.0
          %1529 = vmatpush1.msra.mxu0 0.0
          %1530 = vmatprep.subr.mxu0 0.0
          %1531 = vmatpush1.msra.mxu0 0.0
          %1532 = vmatprep.subr.mxu0 0.0
          %1533 = vmatpush1.msra.mxu0 0.0
          %1534 = vmatprep.subr.mxu0 0.0
          %1535 = vmatpush1.msra.mxu0 0.0
          %1536 = vmatprep.subr.mxu0 0.0
          %1537 = vmatpush1.msra.mxu0 0.0
          %1538 = vmatprep.subr.mxu0 0.0
          %1539 = vmatpush1.msra.mxu0 0.0
          %1540 = vmatprep.subr.mxu0 0.0
          %1541 = vmatpush1.msra.mxu0 0.0
          %1542 = vmatprep.subr.mxu0 0.0
          %1543 = vmatpush1.msra.mxu0 0.0
          %1544 = vmatprep.subr.mxu0 0.0
          %1545 = vmatpush1.msra.mxu0 0.0
          %1546 = vmatprep.subr.mxu0 0.0
          %1547 = vmatpush1.msra.mxu0 0.0
          %1548 = vmatprep.subr.mxu0 0.0
          %1549 = vmatpush1.msra.mxu0 0.0
          %1550 = vmatprep.subr.mxu0 0.0
          %1551 = vmatpush1.msra.mxu0 0.0
          %1552 = vmatprep.mubr.f32.mxu0 0.0
          %1553 = vmatmul.mubr.f32.gmra.mrb[0].mxu0 %v1486
          %v1554 = vpop.f32.mrb[0].mxu0
          %v1555 = vadd.f32 0.0, %v1554
          %v1556 = vpop.f32.mrb[0].mxu0
          %1557 = vdwg.mxu0
          %v1558 = vadd.f32 %v1481, %v1555
          %1559 = vst.msk [vmem:[%s1474] sm:$0xff] %vm803, %v1558
          %1560 = vst.msk [vmem:[%s1449] sm:$0xff] %vm902, %v1454
        $region92: #{tpu_custom_call.1} parent=59 // pred_fallthru
          _
        // Predicated region
        $region93: #{tpu_custom_call.1} parent=59 // pred_check
          %p1561 = pneg %p497
        $region94: #{tpu_custom_call.1} parent=59 // pred_check_branch
          %1563 = sbr.rel (%p1561) target = $region96
        $region95: #{tpu_custom_call.1} parent=59 // pred_region
          %v1564 = vld [vmem:[#allocation4] sm:$0xff]
          %v1565 = vrcp.pop %v1564
          %v1566 = vmul.f32 1.0, %v1565
          %v1567 = vld [vmem:[#allocation5] sm:$0xff]
          %1569 = vset.pattern.permute.xlu0 0
          %1570 = vperm.xlu0 %1569, %v1566
          %v1571 = vpop.permute.xlu0 %1570
          %v1573 = vmul.f32 %v1567, %v1571
          %vm1574 = vcmask 64512
          %1575 = vst.msk [vmem:[#allocation6] sm:$0xff] %vm1574, %v1573
          %s1576 = scalar_lea.vmem [#allocation4], 8
          %v1577 = vld [vmem:[%s1576] sm:$0xff]
          %v1578 = vrcp.pop %v1577
          %v1579 = vmul.f32 1.0, %v1578
          %s1580 = scalar_lea.vmem [#allocation5], 8
          %v1581 = vld [vmem:[%s1580] sm:$0xff]
          %1583 = vset.pattern.permute.xlu0 0
          %1584 = vperm.xlu0 %1583, %v1579
          %v1585 = vpop.permute.xlu0 %1584
          %v1587 = vmul.f32 %v1581, %v1585
          %1589 = vrot.lane.b32.xlu0 %v1587, 8
          %v1590 = vpop.permute.xlu0 %1589
          %vm1592 = vcmask 130112
          %1593 = vst.msk [vmem:[#allocation6] sm:$0xff] %vm1592, %v1590
          %s1594 = scalar_lea.vmem [#allocation4], 16
          %v1595 = vld [vmem:[%s1594] sm:$0xff]
          %v1596 = vrcp.pop %v1595
          %v1597 = vmul.f32 1.0, %v1596
          %s1598 = scalar_lea.vmem [#allocation5], 16
          %v1599 = vld [vmem:[%s1598] sm:$0xff]
          %1601 = vset.pattern.permute.xlu0 0
          %1602 = vperm.xlu0 %1601, %v1597
          %v1603 = vpop.permute.xlu0 %1602
          %v1605 = vmul.f32 %v1599, %v1603
          %1607 = vrot.lane.b32.xlu0 %v1605, 16
          %v1608 = vpop.permute.xlu0 %1607
          %vm1610 = vcmask 195712
          %1611 = vst.msk [vmem:[#allocation6] sm:$0xff] %vm1610, %v1608
          %s1612 = scalar_lea.vmem [#allocation4], 24
          %v1613 = vld [vmem:[%s1612] sm:$0xff]
          %v1614 = vrcp.pop %v1613
          %v1615 = vmul.f32 1.0, %v1614
          %s1616 = scalar_lea.vmem [#allocation5], 24
          %v1617 = vld [vmem:[%s1616] sm:$0xff]
          %1619 = vset.pattern.permute.xlu0 0
          %1620 = vperm.xlu0 %1619, %v1615
          %v1621 = vpop.permute.xlu0 %1620
          %v1623 = vmul.f32 %v1617, %v1621
          %1625 = vrot.lane.b32.xlu0 %v1623, 24
          %v1626 = vpop.permute.xlu0 %1625
          %vm1628 = vcmask 261312
          %1629 = vst.msk [vmem:[#allocation6] sm:$0xff] %vm1628, %v1626
          %v1630 = vld [vmem:[#allocation6] sm:$0xff]
          %v1631 = vld [vmem:[#allocation16] sm:$0xff]
          %v1632 = vld [vmem:[#allocation16 + $0x8] sm:$0xff]
          %v1633 = vld [vmem:[#allocation16 + $0x10] sm:$0xff]
          %v1634 = vld [vmem:[#allocation16 + $0x18] sm:$0xff]
          %v1635 = vld [vmem:[%s9] sm:$0x1]
          %v1637 = vlaneseq
          %v1638 = vshrl.u32 %v1637, 7
          %v1639 = vsub.s32 0, %v1638
          %v1640 = vrot.slane %v1635, %v1639
          %vm1642 = vcmask 261120
          %v1644 = vsel %vm1642, %v1630, 0
          %1646 = vmatprep.subr.mxu0 0.0
          %1647 = vmatpush1.msra.mxu0 %v1631
          %1648 = vmatprep.subr.mxu0 0.0
          %1649 = vmatpush1.msra.mxu0 %v1632
          %1650 = vmatprep.subr.mxu0 0.0
          %1651 = vmatpush1.msra.mxu0 %v1633
          %1652 = vmatprep.subr.mxu0 0.0
          %1653 = vmatpush1.msra.mxu0 %v1634
          %1654 = vmatprep.subr.mxu0 0.0
          %1655 = vmatpush1.msra.mxu0 0.0
          %1656 = vmatprep.subr.mxu0 0.0
          %1657 = vmatpush1.msra.mxu0 0.0
          %1658 = vmatprep.subr.mxu0 0.0
          %1659 = vmatpush1.msra.mxu0 0.0
          %1660 = vmatprep.subr.mxu0 0.0
          %1661 = vmatpush1.msra.mxu0 0.0
          %1662 = vmatprep.subr.mxu0 0.0
          %1663 = vmatpush1.msra.mxu0 0.0
          %1664 = vmatprep.subr.mxu0 0.0
          %1665 = vmatpush1.msra.mxu0 0.0
          %1666 = vmatprep.subr.mxu0 0.0
          %1667 = vmatpush1.msra.mxu0 0.0
          %1668 = vmatprep.subr.mxu0 0.0
          %1669 = vmatpush1.msra.mxu0 0.0
          %1670 = vmatprep.subr.mxu0 0.0
          %1671 = vmatpush1.msra.mxu0 0.0
          %1672 = vmatprep.subr.mxu0 0.0
          %1673 = vmatpush1.msra.mxu0 0.0
          %1674 = vmatprep.subr.mxu0 0.0
          %1675 = vmatpush1.msra.mxu0 0.0
          %1676 = vmatprep.subr.mxu0 0.0
          %1677 = vmatpush1.msra.mxu0 0.0
          %1678 = vmatprep.subr.mxu0 0.0
          %1679 = vmatpush1.msra.mxu0 0.0
          %1680 = vmatprep.subr.mxu0 0.0
          %1681 = vmatpush1.msra.mxu0 0.0
          %1682 = vmatprep.subr.mxu0 0.0
          %1683 = vmatpush1.msra.mxu0 0.0
          %1684 = vmatprep.subr.mxu0 0.0
          %1685 = vmatpush1.msra.mxu0 0.0
          %1686 = vmatprep.subr.mxu0 0.0
          %1687 = vmatpush1.msra.mxu0 0.0
          %1688 = vmatprep.subr.mxu0 0.0
          %1689 = vmatpush1.msra.mxu0 0.0
          %1690 = vmatprep.subr.mxu0 0.0
          %1691 = vmatpush1.msra.mxu0 0.0
          %1692 = vmatprep.subr.mxu0 0.0
          %1693 = vmatpush1.msra.mxu0 0.0
          %1694 = vmatprep.subr.mxu0 0.0
          %1695 = vmatpush1.msra.mxu0 0.0
          %1696 = vmatprep.subr.mxu0 0.0
          %1697 = vmatpush1.msra.mxu0 0.0
          %1698 = vmatprep.subr.mxu0 0.0
          %1699 = vmatpush1.msra.mxu0 0.0
          %1700 = vmatprep.subr.mxu0 0.0
          %1701 = vmatpush1.msra.mxu0 0.0
          %1702 = vmatprep.subr.mxu0 0.0
          %1703 = vmatpush1.msra.mxu0 0.0
          %1704 = vmatprep.subr.mxu0 0.0
          %1705 = vmatpush1.msra.mxu0 0.0
          %1706 = vmatprep.subr.mxu0 0.0
          %1707 = vmatpush1.msra.mxu0 0.0
          %1708 = vmatprep.subr.mxu0 0.0
          %1709 = vmatpush1.msra.mxu0 0.0
          %1710 = vmatprep.mubr.f32.mxu0 0.0
          %1711 = vmatmul.mubr.f32.gmra.mrb[0].mxu0 %v1644
          %v1712 = vpop.f32.mrb[0].mxu0
          %v1713 = vadd.f32 %v1640, %v1712
          %v1714 = vpop.f32.mrb[0].mxu0
          %1715 = vdwg.mxu0
          %1716 = vst.msk [vmem:[%s496] sm:$0xff] %vm1642, %v1713
        $region96: #{tpu_custom_call.1} parent=59 // pred_fallthru
          _
        %s1717 = sand.u32 %s285, 1
        %s1718 = scalar_lea.sflag [#allocation9], %s1717
        %s1719 = sand.u32 %s285, 1
        %s1720 = smul.addr %s1719, 8
        %s1721 = scalar_lea.vmem [#allocation18], %s1720
        // Predicated region
        $region97: #{tpu_custom_call.1} parent=59 // pred_check
          %p1722 = pneg %p295
        $region98: #{tpu_custom_call.1} parent=59 // pred_check_branch
          %1724 = sbr.rel (%p1722) target = $region100
        $region99: #{tpu_custom_call.1} parent=59 // pred_region
          %s1726 = ssub.s32 128, 128
          %1727 = vsyncadd %s1718, %s1726
          %s1728 = sadd.s32 %s38, %s37
          %s1729 = smul.addr %s1728, 128
          %s1730 = scalar_lea.hbm %s10, %s1729
          %s1732 = sshll.u32 %s1721, 4
          %s1733 = int_to_ptr.vmem [resolvable:$true] %s1732
          %1735 = dma.vmem_to_hbm [thread:$0]  %s1733, 128, %s1730, %s1718
        $region100: #{tpu_custom_call.1} parent=59 // pred_fallthru
          _
      $region60: #{tpu_custom_call.1} parent=5 // pred_fallthru
        _
      %p1736 = scmp.le.s32.totalorder 2, %s27
      // Predicated region
      $region101: #{tpu_custom_call.1} parent=5 // pred_check
        %p1737 = pneg %p1736
      $region102: #{tpu_custom_call.1} parent=5 // pred_check_branch
        %1739 = sbr.rel (%p1737) target = $region104
      $region103: #{tpu_custom_call.1} parent=5 // pred_region
        %s1740 = ssub.s32 %s27, 2
        // Predicated region
        $region105: #{tpu_custom_call.1} parent=103 // pred_check
          %p1741 = pneg %p301
        $region106: #{tpu_custom_call.1} parent=103 // pred_check_branch
          %1743 = sbr.rel (%p1741) target = $region108
        $region107: #{tpu_custom_call.1} parent=103 // pred_region
          %s1744 = sand.u32 %s286, 1
          %s1745 = scalar_lea.sflag [#allocation9], %s1744
          %s1746 = sand.u32 %s286, 1
          %s1747 = smul.addr %s1746, 8
          %s1748 = scalar_lea.vmem [#allocation18], %s1747
          %1749 = dma.done %s1745, 128
        $region108: #{tpu_custom_call.1} parent=103 // pred_fallthru
          _
      $region104: #{tpu_custom_call.1} parent=5 // pred_fallthru
        _
    $region6: #{tpu_custom_call.1} parent=1 // loop_footer
      %s31 = sadd.s32 1, %s27
    $region7: #{tpu_custom_call.1} parent=1 // loop_footer_branch
      %26 = sbr.rel target = $region3
    $region8: #{tpu_custom_call.1} parent=1 // loop_exit
      _
    %1750 = vsyncpa [#allocation8], 1
    %s1751 = scalar_lea.sflag [#allocation8], 1
    %1752 = vsyncpa %s1751, 1
    %1753 = vsyncpa [#allocation11], 1
    %s1754 = scalar_lea.sflag [#allocation11], 1
    %1755 = vsyncpa %s1754, 1
    %1756 = vsyncpa [#allocation14], 1
    %1757 = vsyncpa [#allocation17], 1
    %1758 = vsyncpa [#allocation9], 1
    %s1759 = scalar_lea.sflag [#allocation9], 1
    %1760 = vsyncpa %s1759, 1

</llo_original>
